<compile_context>
chip_gen: v7x
topology: tpu7x:2x2x1
jax: 0.10.0
libtpu: 0.0.40
codegen_flags: <defaults>
</compile_context>

<pallas_src>
import functools

import jax
import jax.numpy as jnp
from jax.experimental import pallas as pl
from jax.experimental.pallas import tpu as pltpu


def _round_up(x, m):
    return (x + m - 1) // m * m


def _fused_kernel(x_ref, w0_ref, w_ref, b_ref, o_ref, stage0, buf_a, buf_b, *,
                  cfgs, filter_sz, pool_sz, c_pad, b_blk, slab, off,
                  cin0, l0, ext_lead, ext_trail, tail):
    """All conv+pool+relu blocks for one batch block; intermediates stay in VMEM.

    Slab layout: each of the b_blk batch elements owns `slab` consecutive rows of the
    (M = b_blk*slab)-row working set; its data lives at in-slab rows [off, off+len) and
    every other row is zero (these zero rows are the conv zero padding and the pool
    pad rows).  acc[b*slab + i] == conv_out[i - (off - cp)].
    """
    M = b_blk * slab
    num_layers = len(cfgs)

    # ---- stage the (b_blk, l0, cin0) input block into slab layout.  The buffer is
    #      narrow (cin0 lanes): no 128-wide channel pad, layer 0 contracts over cin0.
    stage0[...] = jnp.zeros(stage0.shape, jnp.float32)
    for b in range(b_blk):                               # static unroll, small
        r0 = b * slab + off
        stage0[r0:r0 + l0, :] = x_ref[b]

    # ---- hoisted in-slab row index, built once per grid step, reused by all layers.
    q1 = jax.lax.broadcasted_iota(jnp.int32, (slab, c_pad), 0)
    row_q = jnp.concatenate([q1] * b_blk, axis=0) if b_blk > 1 else q1   # (M, c_pad)

    zlead = jnp.zeros((ext_lead, c_pad), jnp.float32)
    ztrail = jnp.zeros((ext_trail, c_pad), jnp.float32)
    ztail = jnp.zeros((tail, c_pad), jnp.float32)

    bufs = (buf_a, buf_b)
    for l, (cp, l_conv, l_pool) in enumerate(cfgs):
        # Source activations; bf16 matmul operands, f32 accumulation on the MXU.
        if l == 0:
            src = stage0[...].astype(jnp.bfloat16)               # (M+tail, cin0)
        else:
            src = bufs[(l - 1) % 2][...].astype(jnp.bfloat16)    # (M+tail, c_pad)

        # Conv1d as filter_sz tap matmuls over the whole batch block (M rows folded).
        acc = jnp.zeros((M, c_pad), jnp.float32)
        for k in range(filter_sz):                       # static, unrolled
            w_k = w0_ref[k] if l == 0 else w_ref[l - 1, k]
            acc = acc + jnp.dot(src[k:k + M, :], w_k,
                                preferred_element_type=jnp.float32)
        acc = acc + b_ref[l]                             # (1, c_pad) broadcast, f32

        # Keep only true conv-output rows; everything else becomes 0 (0 doubles as the
        # -inf pool padding because ReLU follows the pool).
        s = off - cp                                     # acc row of conv_out[0]
        acc = jnp.where((row_q >= s) & (row_q <= s + l_conv - 1), acc, 0.0)

        # MaxPool1d(pool_sz, stride=1, padding=1) + ReLU, expressed directly in the
        # destination slab coordinates so the store below is one full aligned store.
        acc_ext = jnp.concatenate([zlead, acc, ztrail], axis=0)
        base = ext_lead - cp - 1
        pooled = acc_ext[base:base + M, :]
        for m in range(1, pool_sz):                      # static, unrolled
            pooled = jnp.maximum(pooled, acc_ext[base + m:base + m + M, :])
        out = jnp.maximum(pooled, 0.0)
        out = jnp.where((row_q >= off) & (row_q < off + l_pool), out, 0.0)
        # TODO(synk): nn.Dropout(p_drop) is inference-mode identity; training-mode
        # dropout would use pltpu.prng_seed/prng_random_bits and 1/(1-p) scaling here.

        if l == num_layers - 1:
            o_ref[...] = out[None, :, :]
        else:
            # Full-buffer, lane-dense, sublane-aligned store; the mask above rebuilds
            # the zero margins, so the ping-pong buffers never need a memset.
            bufs[l % 2][...] = jnp.concatenate([out, ztail], axis=0)


def _forward_impl(x_ncw, params, *, filter_sz, pool_sz, b_blk=8):
    n, cin0, l0 = x_ncw.shape
    n_filters = params[0][0].shape[-1]
    num_layers = len(params)
    c_pad = _round_up(n_filters, 128)
    off = 2                                    # >= max conv pad + 1

    # Per-layer geometry (conv pad 0 for layer 0, 1 afterwards; pool pad 1, stride 1).
    geoms = []                                 # (cp, l_in, l_conv, l_pool)
    l_in = l0
    for l in range(num_layers):
        cp = 0 if l == 0 else 1
        l_conv = l_in + 2 * cp - filter_sz + 1
        l_pool = l_conv + 2 - pool_sz + 1
        geoms.append((cp, l_in, l_conv, l_pool))
        l_in = l_pool
    l_out = geoms[-1][3]
    cfgs = tuple((g[0], g[2], g[3]) for g in geoms)

    # Slab size: per element, data at in-slab rows [off, off+len); margins are zero.
    slab = _round_up(max(off + max(g[1], g[3]) + g[0] + 1 for g in geoms), 8)
    b_blk = max(1, min(b_blk, n))
    n_pad = _round_up(n, b_blk)
    n_blocks = n_pad // b_blk
    M = b_blk * slab
    tail = _round_up(max(filter_sz - 1, 1), 8)
    ext_lead = 8
    ext_trail = _round_up(max(pool_sz, 1), 8)
    nbuf = M + tail

    # Weight stacks: layer 0 keeps its true input-channel count (K = cin0); the
    # remaining layers share one resident bf16 stack.  Padded channels stay zero
    # through every layer (0-weights, 0-bias, pool of 0, relu(0) = 0).
    w0 = jnp.zeros((filter_sz, cin0, c_pad), jnp.bfloat16)
    w0 = w0.at[:, :, :n_filters].set(params[0][0].astype(jnp.bfloat16))
    n_rest = max(num_layers - 1, 1)
    w_rest = jnp.zeros((n_rest, filter_sz, c_pad, c_pad), jnp.bfloat16)
    b_stack = jnp.zeros((num_layers, 1, c_pad), jnp.float32)
    b_stack = b_stack.at[0, 0, :n_filters].set(
        params[0][1].reshape(-1).astype(jnp.float32))
    for l in range(1, num_layers):
        w, b = params[l]
        ci, co = w.shape[1], w.shape[2]
        w_rest = w_rest.at[l - 1, :, :ci, :co].set(w.astype(jnp.bfloat16))
        b_stack = b_stack.at[l, 0, :co].set(b.reshape(-1).astype(jnp.float32))

    # Input stays in native NWC; channel padding never touches HBM.
    x_nwc = jnp.transpose(x_ncw, (0, 2, 1)).astype(jnp.float32)
    if n_pad != n:
        x_nwc = jnp.concatenate(
            [x_nwc, jnp.zeros((n_pad - n, l0, cin0), jnp.float32)], axis=0)

    kernel = functools.partial(
        _fused_kernel, cfgs=cfgs, filter_sz=filter_sz, pool_sz=pool_sz,
        c_pad=c_pad, b_blk=b_blk, slab=slab, off=off, cin0=cin0, l0=l0,
        ext_lead=ext_lead, ext_trail=ext_trail, tail=tail)

    flops = 2 * n_blocks * M * c_pad * filter_sz * (cin0 + (num_layers - 1) * c_pad)
    bytes_accessed = (n_pad * l0 * cin0 * 4 + w0.size * 2 + w_rest.size * 2
                      + b_stack.size * 4 + n_blocks * M * c_pad * 4)

    out_slab = pl.pallas_call(
        kernel,
        out_shape=jax.ShapeDtypeStruct((n_blocks, M, c_pad), jnp.float32),
        grid=(n_blocks,),
        in_specs=[
            pl.BlockSpec((b_blk, l0, cin0), lambda i: (i, 0, 0)),
            pl.BlockSpec((filter_sz, cin0, c_pad), lambda i: (0, 0, 0)),
            pl.BlockSpec((n_rest, filter_sz, c_pad, c_pad),
                         lambda i: (0, 0, 0, 0)),                 # resident weights
            pl.BlockSpec((num_layers, 1, c_pad), lambda i: (0, 0, 0)),
        ],
        out_specs=pl.BlockSpec((1, M, c_pad), lambda i: (i, 0, 0)),
        scratch_shapes=[pltpu.VMEM((nbuf, cin0), jnp.float32),    # narrow input stage
                        pltpu.VMEM((nbuf, c_pad), jnp.float32),   # ping
                        pltpu.VMEM((nbuf, c_pad), jnp.float32)],  # pong
        compiler_params=pltpu.CompilerParams(
            dimension_semantics=("parallel",)),                   # both TCs on v7x
        cost_estimate=pl.CostEstimate(flops=flops, transcendentals=0,
                                      bytes_accessed=bytes_accessed),
    )(x_nwc, w0, w_rest, b_stack)

    # (n_blocks, M, 128) -> (n_pad, slab, 128) -> strip batch pad / margins / channels.
    y = out_slab.reshape(n_pad, slab, c_pad)[:n, off:off + l_out, :n_filters]
    return jnp.transpose(y, (0, 2, 1))          # back to NCW like nn.Conv1d


conv_pool_relu_dropout_forward = jax.jit(
    _forward_impl, static_argnames=("filter_sz", "pool_sz", "b_blk"))


def init_params(key, title_dim, n_filters, filter_sz, num_conv):
    """Deterministic Conv1d parameters.  Weight layout: (filter_sz, Cin, Cout); bias (Cout,)."""
    params = []
    cin = title_dim
    for _ in range(1 + num_conv):
        key, kw, kb = jax.random.split(key, 3)
        bound = 1.0 / (cin * filter_sz) ** 0.5
        w = jax.random.uniform(kw, (filter_sz, cin, n_filters),
                               jnp.float32, -bound, bound)
        b = jax.random.uniform(kb, (n_filters,), jnp.float32, -bound, bound)
        params.append((w, b))
        cin = n_filters
    return params


# ----------------------- pure-JAX reference (for checking) -----------------------
def _reference_forward(x_ncw, params, *, filter_sz, pool_sz):
    x = jnp.transpose(x_ncw, (0, 2, 1))
    for blk, (w, b) in enumerate(params):
        conv_pad = 0 if blk == 0 else 1
        out = jax.lax.conv_general_dilated(
            x, w, window_strides=(1,), padding=[(conv_pad, conv_pad)],
            dimension_numbers=("NWC", "WIO", "NWC"))
        out = out + b
        out = jax.lax.reduce_window(
            out, -jnp.inf, jax.lax.max,
            window_dimensions=(1, pool_sz, 1),
            window_strides=(1, 1, 1),
            padding=[(0, 0), (1, 1), (0, 0)])
        x = jnp.maximum(out, 0.0)
    return jnp.transpose(x, (0, 2, 1))


if __name__ == "__main__":
    # Small, module-consistent sizes.
    batch, title_dim, seq_len = 4, 4, 16
    n_filters, filter_sz, pool_sz = 8, 3, 3
    p_drop, num_conv = 0.5, 2

    key = jax.random.PRNGKey(0)
    key, kx = jax.random.split(key)
    x = jax.random.normal(kx, (batch, title_dim, seq_len), jnp.float32)
    params = init_params(key, title_dim, n_filters, filter_sz, num_conv)

    # b_blk=2 -> grid=(2,): exercises batch blocking, multi-step grid and scratch reuse.
    out = conv_pool_relu_dropout_forward(x, params, filter_sz=filter_sz,
                                         pool_sz=pool_sz, b_blk=2)
    out = jax.block_until_ready(out)

    ref = _reference_forward(x, params, filter_sz=filter_sz, pool_sz=pool_sz)
    assert out.shape == ref.shape, (out.shape, ref.shape)
    # bf16 matmul operands (f32 accumulation) vs. an f32 reference: loosen tolerance.
    assert jnp.allclose(out, ref, atol=5e-2, rtol=5e-2), "mismatch vs reference"

    print("KERNEL_OK")
</pallas_src>

<mosaic_0001>
module attributes {stable_mosaic.version = 11 : i64} {
  func.func @_fused_kernel(%arg0: i32, %arg1: memref<2x16x4xf32, #tpu.memory_space<vmem>>, %arg2: memref<3x4x128xbf16, #tpu.memory_space<vmem>>, %arg3: memref<2x3x128x128xbf16, #tpu.memory_space<vmem>>, %arg4: memref<3x1x128xf32, #tpu.memory_space<vmem>>, %arg5: memref<1x48x128xf32, #tpu.memory_space<vmem>>, %arg6: memref<56x4xf32, #tpu.memory_space<vmem>>, %arg7: memref<56x128xf32, #tpu.memory_space<vmem>>, %arg8: memref<56x128xf32, #tpu.memory_space<vmem>>) attributes {dimension_semantics = [#tpu.dimension_semantics<parallel>], iteration_bounds = array<i64: 2>, scalar_prefetch = 0 : i64, scratch_operands = 3 : i64, tpu.core_type = #tpu.core_type<tc>, window_params = [{transform_indices = @transform_0, window_bounds = array<i64: 2, 16, 4>}, {pipeline_mode = #tpu.pipeline_mode<synchronous>, transform_indices = @transform_1, window_bounds = array<i64: 3, 4, 128>}, {pipeline_mode = #tpu.pipeline_mode<synchronous>, transform_indices = @transform_2, window_bounds = array<i64: 2, 3, 128, 128>}, {pipeline_mode = #tpu.pipeline_mode<synchronous>, transform_indices = @transform_3, window_bounds = array<i64: 3, 1, 128>}, {transform_indices = @transform_4, window_bounds = array<i64: 1, 48, 128>}]} {
    %cst = arith.constant 0.000000e+00 : f32
    %0 = vector.broadcast %cst : f32 to vector<56x4xf32>
    %c0 = arith.constant 0 : index
    %c0_0 = arith.constant 0 : index
    %1 = vector.load %arg6[%c0, %c0_0] : memref<56x4xf32, #tpu.memory_space<vmem>>, vector<56x4xf32>
    tpu.vector_store %arg6[%c0, %c0_0], %0 {strides = array<i32>} : memref<56x4xf32, #tpu.memory_space<vmem>>, vector<56x4xf32>,
    %c0_1 = arith.constant 0 : index
    %c0_2 = arith.constant 0 : index
    %c0_3 = arith.constant 0 : index
    %2 = vector.load %arg1[%c0_1, %c0_2, %c0_3] : memref<2x16x4xf32, #tpu.memory_space<vmem>>, vector<1x16x4xf32>
    %3 = vector.shape_cast %2 : vector<1x16x4xf32> to vector<16x4xf32>
    %c2 = arith.constant 2 : index
    %c0_4 = arith.constant 0 : index
    %4 = vector.load %arg6[%c2, %c0_4] : memref<56x4xf32, #tpu.memory_space<vmem>>, vector<16x4xf32>
    tpu.vector_store %arg6[%c2, %c0_4], %3 {strides = array<i32>} : memref<56x4xf32, #tpu.memory_space<vmem>>, vector<16x4xf32>,
    %c1 = arith.constant 1 : index
    %c0_5 = arith.constant 0 : index
    %c0_6 = arith.constant 0 : index
    %5 = vector.load %arg1[%c1, %c0_5, %c0_6] : memref<2x16x4xf32, #tpu.memory_space<vmem>>, vector<1x16x4xf32>
    %6 = vector.shape_cast %5 : vector<1x16x4xf32> to vector<16x4xf32>
    %c26 = arith.constant 26 : index
    %c0_7 = arith.constant 0 : index
    %7 = vector.load %arg6[%c26, %c0_7] : memref<56x4xf32, #tpu.memory_space<vmem>>, vector<16x4xf32>
    tpu.vector_store %arg6[%c26, %c0_7], %6 {strides = array<i32>} : memref<56x4xf32, #tpu.memory_space<vmem>>, vector<16x4xf32>,
    %8 = tpu.iota {dimensions = array<i32: 0>} : vector<24x128xi32>
    %9 = tpu.concatenate %8, %8 in 0 : vector<24x128xi32>, vector<24x128xi32> -> vector<48x128xi32>
    %cst_8 = arith.constant 0.000000e+00 : f32
    %10 = vector.broadcast %cst_8 : f32 to vector<8x128xf32>
    %cst_9 = arith.constant 0.000000e+00 : f32
    %11 = vector.broadcast %cst_9 : f32 to vector<8x128xf32>
    %cst_10 = arith.constant 0.000000e+00 : f32
    %12 = vector.broadcast %cst_10 : f32 to vector<8x128xf32>
    %c0_11 = arith.constant 0 : index
    %c0_12 = arith.constant 0 : index
    %13 = vector.load %arg6[%c0_11, %c0_12] : memref<56x4xf32, #tpu.memory_space<vmem>>, vector<56x4xf32>
    %14 = arith.truncf %13 : vector<56x4xf32> to vector<56x4xbf16>
    %cst_13 = arith.constant 0.000000e+00 : f32
    %15 = vector.broadcast %cst_13 : f32 to vector<48x128xf32>
    %c0_14 = arith.constant 0 : index
    %c0_15 = arith.constant 0 : index
    %c0_16 = arith.constant 0 : index
    %16 = vector.load %arg2[%c0_14, %c0_15, %c0_16] : memref<3x4x128xbf16, #tpu.memory_space<vmem>>, vector<1x4x128xbf16>
    %17 = vector.shape_cast %16 : vector<1x4x128xbf16> to vector<4x128xbf16>
    %18 = vector.extract_strided_slice %14 {offsets = [0, 0], sizes = [48, 4], strides = [1, 1]} : vector<56x4xbf16> to vector<48x4xbf16>
    %cst_17 = arith.constant dense<0.000000e+00> : vector<48x128xf32>
    %19 = tpu.matmul %18, %17, %cst_17 {dimension_numbers = #tpu.dot_dimension_numbers<[1], [0], [0], [1], [0, 0, 1, 1], [], []>} : vector<48x4xbf16>, vector<4x128xbf16>, vector<48x128xf32> -> vector<48x128xf32>
    %20 = arith.addf %15, %19 : vector<48x128xf32>
    %c1_18 = arith.constant 1 : index
    %c0_19 = arith.constant 0 : index
    %c0_20 = arith.constant 0 : index
    %21 = vector.load %arg2[%c1_18, %c0_19, %c0_20] : memref<3x4x128xbf16, #tpu.memory_space<vmem>>, vector<1x4x128xbf16>
    %22 = vector.shape_cast %21 : vector<1x4x128xbf16> to vector<4x128xbf16>
    %23 = vector.extract_strided_slice %14 {offsets = [1, 0], sizes = [48, 4], strides = [1, 1]} : vector<56x4xbf16> to vector<48x4xbf16>
    %cst_21 = arith.constant dense<0.000000e+00> : vector<48x128xf32>
    %24 = tpu.matmul %23, %22, %cst_21 {dimension_numbers = #tpu.dot_dimension_numbers<[1], [0], [0], [1], [0, 0, 1, 1], [], []>} : vector<48x4xbf16>, vector<4x128xbf16>, vector<48x128xf32> -> vector<48x128xf32>
    %25 = arith.addf %20, %24 : vector<48x128xf32>
    %c2_22 = arith.constant 2 : index
    %c0_23 = arith.constant 0 : index
    %c0_24 = arith.constant 0 : index
    %26 = vector.load %arg2[%c2_22, %c0_23, %c0_24] : memref<3x4x128xbf16, #tpu.memory_space<vmem>>, vector<1x4x128xbf16>
    %27 = vector.shape_cast %26 : vector<1x4x128xbf16> to vector<4x128xbf16>
    %28 = vector.extract_strided_slice %14 {offsets = [2, 0], sizes = [48, 4], strides = [1, 1]} : vector<56x4xbf16> to vector<48x4xbf16>
    %cst_25 = arith.constant dense<0.000000e+00> : vector<48x128xf32>
    %29 = tpu.matmul %28, %27, %cst_25 {dimension_numbers = #tpu.dot_dimension_numbers<[1], [0], [0], [1], [0, 0, 1, 1], [], []>} : vector<48x4xbf16>, vector<4x128xbf16>, vector<48x128xf32> -> vector<48x128xf32>
    %30 = arith.addf %25, %29 : vector<48x128xf32>
    %c0_26 = arith.constant 0 : index
    %c0_27 = arith.constant 0 : index
    %c0_28 = arith.constant 0 : index
    %31 = vector.load %arg4[%c0_26, %c0_27, %c0_28] : memref<3x1x128xf32, #tpu.memory_space<vmem>>, vector<1x1x128xf32>
    %32 = vector.shape_cast %31 : vector<1x1x128xf32> to vector<1x128xf32>
    %33 = vector.broadcast %32 : vector<1x128xf32> to vector<48x128xf32>
    %34 = arith.addf %30, %33 : vector<48x128xf32>
    %c2_i32 = arith.constant 2 : i32
    %35 = vector.broadcast %c2_i32 : i32 to vector<48x128xi32>
    %36 = arith.cmpi sge, %9, %35 : vector<48x128xi32>
    %c15_i32 = arith.constant 15 : i32
    %37 = vector.broadcast %c15_i32 : i32 to vector<48x128xi32>
    %38 = arith.cmpi sle, %9, %37 : vector<48x128xi32>
    %39 = arith.andi %36, %38 : vector<48x128xi1>
    %cst_29 = arith.constant 0.000000e+00 : f32
    %40 = vector.broadcast %cst_29 : f32 to vector<48x128xf32>
    %41 = arith.select %39, %34, %40 : vector<48x128xi1>, vector<48x128xf32>
    %42 = tpu.concatenate %10, %41, %11 in 0 : vector<8x128xf32>, vector<48x128xf32>, vector<8x128xf32> -> vector<64x128xf32>
    %43 = vector.extract_strided_slice %42 {offsets = [7, 0], sizes = [48, 128], strides = [1, 1]} : vector<64x128xf32> to vector<48x128xf32>
    %44 = vector.extract_strided_slice %42 {offsets = [8, 0], sizes = [48, 128], strides = [1, 1]} : vector<64x128xf32> to vector<48x128xf32>
    %45 = arith.maximumf %43, %44 : vector<48x128xf32>
    %46 = vector.extract_strided_slice %42 {offsets = [9, 0], sizes = [48, 128], strides = [1, 1]} : vector<64x128xf32> to vector<48x128xf32>
    %47 = arith.maximumf %45, %46 : vector<48x128xf32>
    %cst_30 = arith.constant 0.000000e+00 : f32
    %48 = vector.broadcast %cst_30 : f32 to vector<48x128xf32>
    %49 = arith.maximumf %47, %48 : vector<48x128xf32>
    %c2_i32_31 = arith.constant 2 : i32
    %50 = vector.broadcast %c2_i32_31 : i32 to vector<48x128xi32>
    %51 = arith.cmpi sge, %9, %50 : vector<48x128xi32>
    %c16_i32 = arith.constant 16 : i32
    %52 = vector.broadcast %c16_i32 : i32 to vector<48x128xi32>
    %53 = arith.cmpi slt, %9, %52 : vector<48x128xi32>
    %54 = arith.andi %51, %53 : vector<48x128xi1>
    %cst_32 = arith.constant 0.000000e+00 : f32
    %55 = vector.broadcast %cst_32 : f32 to vector<48x128xf32>
    %56 = arith.select %54, %49, %55 : vector<48x128xi1>, vector<48x128xf32>
    %57 = tpu.concatenate %56, %12 in 0 : vector<48x128xf32>, vector<8x128xf32> -> vector<56x128xf32>
    %c0_33 = arith.constant 0 : index
    %c0_34 = arith.constant 0 : index
    %58 = vector.load %arg7[%c0_33, %c0_34] : memref<56x128xf32, #tpu.memory_space<vmem>>, vector<56x128xf32>
    tpu.vector_store %arg7[%c0_33, %c0_34], %57 {strides = array<i32>} : memref<56x128xf32, #tpu.memory_space<vmem>>, vector<56x128xf32>,
    %c0_35 = arith.constant 0 : index
    %c0_36 = arith.constant 0 : index
    %59 = vector.load %arg7[%c0_35, %c0_36] : memref<56x128xf32, #tpu.memory_space<vmem>>, vector<56x128xf32>
    %60 = arith.truncf %59 : vector<56x128xf32> to vector<56x128xbf16>
    %cst_37 = arith.constant 0.000000e+00 : f32
    %61 = vector.broadcast %cst_37 : f32 to vector<48x128xf32>
    %c0_38 = arith.constant 0 : index
    %c0_39 = arith.constant 0 : index
    %c0_40 = arith.constant 0 : index
    %c0_41 = arith.constant 0 : index
    %62 = vector.load %arg3[%c0_38, %c0_39, %c0_40, %c0_41] : memref<2x3x128x128xbf16, #tpu.memory_space<vmem>>, vector<1x1x128x128xbf16>
    %63 = vector.shape_cast %62 : vector<1x1x128x128xbf16> to vector<128x128xbf16>
    %64 = vector.extract_strided_slice %60 {offsets = [0, 0], sizes = [48, 128], strides = [1, 1]} : vector<56x128xbf16> to vector<48x128xbf16>
    %cst_42 = arith.constant dense<0.000000e+00> : vector<48x128xf32>
    %65 = tpu.matmul %64, %63, %cst_42 {dimension_numbers = #tpu.dot_dimension_numbers<[1], [0], [0], [1], [0, 0, 1, 1], [], []>} : vector<48x128xbf16>, vector<128x128xbf16>, vector<48x128xf32> -> vector<48x128xf32>
    %66 = arith.addf %61, %65 : vector<48x128xf32>
    %c0_43 = arith.constant 0 : index
    %c1_44 = arith.constant 1 : index
    %c0_45 = arith.constant 0 : index
    %c0_46 = arith.constant 0 : index
    %67 = vector.load %arg3[%c0_43, %c1_44, %c0_45, %c0_46] : memref<2x3x128x128xbf16, #tpu.memory_space<vmem>>, vector<1x1x128x128xbf16>
    %68 = vector.shape_cast %67 : vector<1x1x128x128xbf16> to vector<128x128xbf16>
    %69 = vector.extract_strided_slice %60 {offsets = [1, 0], sizes = [48, 128], strides = [1, 1]} : vector<56x128xbf16> to vector<48x128xbf16>
    %cst_47 = arith.constant dense<0.000000e+00> : vector<48x128xf32>
    %70 = tpu.matmul %69, %68, %cst_47 {dimension_numbers = #tpu.dot_dimension_numbers<[1], [0], [0], [1], [0, 0, 1, 1], [], []>} : vector<48x128xbf16>, vector<128x128xbf16>, vector<48x128xf32> -> vector<48x128xf32>
    %71 = arith.addf %66, %70 : vector<48x128xf32>
    %c0_48 = arith.constant 0 : index
    %c2_49 = arith.constant 2 : index
    %c0_50 = arith.constant 0 : index
    %c0_51 = arith.constant 0 : index
    %72 = vector.load %arg3[%c0_48, %c2_49, %c0_50, %c0_51] : memref<2x3x128x128xbf16, #tpu.memory_space<vmem>>, vector<1x1x128x128xbf16>
    %73 = vector.shape_cast %72 : vector<1x1x128x128xbf16> to vector<128x128xbf16>
    %74 = vector.extract_strided_slice %60 {offsets = [2, 0], sizes = [48, 128], strides = [1, 1]} : vector<56x128xbf16> to vector<48x128xbf16>
    %cst_52 = arith.constant dense<0.000000e+00> : vector<48x128xf32>
    %75 = tpu.matmul %74, %73, %cst_52 {dimension_numbers = #tpu.dot_dimension_numbers<[1], [0], [0], [1], [0, 0, 1, 1], [], []>} : vector<48x128xbf16>, vector<128x128xbf16>, vector<48x128xf32> -> vector<48x128xf32>
    %76 = arith.addf %71, %75 : vector<48x128xf32>
    %c1_53 = arith.constant 1 : index
    %c0_54 = arith.constant 0 : index
    %c0_55 = arith.constant 0 : index
    %77 = vector.load %arg4[%c1_53, %c0_54, %c0_55] : memref<3x1x128xf32, #tpu.memory_space<vmem>>, vector<1x1x128xf32>
    %78 = vector.shape_cast %77 : vector<1x1x128xf32> to vector<1x128xf32>
    %79 = vector.broadcast %78 : vector<1x128xf32> to vector<48x128xf32>
    %80 = arith.addf %76, %79 : vector<48x128xf32>
    %c1_i32 = arith.constant 1 : i32
    %81 = vector.broadcast %c1_i32 : i32 to vector<48x128xi32>
    %82 = arith.cmpi sge, %9, %81 : vector<48x128xi32>
    %c14_i32 = arith.constant 14 : i32
    %83 = vector.broadcast %c14_i32 : i32 to vector<48x128xi32>
    %84 = arith.cmpi sle, %9, %83 : vector<48x128xi32>
    %85 = arith.andi %82, %84 : vector<48x128xi1>
    %cst_56 = arith.constant 0.000000e+00 : f32
    %86 = vector.broadcast %cst_56 : f32 to vector<48x128xf32>
    %87 = arith.select %85, %80, %86 : vector<48x128xi1>, vector<48x128xf32>
    %88 = tpu.concatenate %10, %87, %11 in 0 : vector<8x128xf32>, vector<48x128xf32>, vector<8x128xf32> -> vector<64x128xf32>
    %89 = vector.extract_strided_slice %88 {offsets = [6, 0], sizes = [48, 128], strides = [1, 1]} : vector<64x128xf32> to vector<48x128xf32>
    %90 = vector.extract_strided_slice %88 {offsets = [7, 0], sizes = [48, 128], strides = [1, 1]} : vector<64x128xf32> to vector<48x128xf32>
    %91 = arith.maximumf %89, %90 : vector<48x128xf32>
    %92 = vector.extract_strided_slice %88 {offsets = [8, 0], sizes = [48, 128], strides = [1, 1]} : vector<64x128xf32> to vector<48x128xf32>
    %93 = arith.maximumf %91, %92 : vector<48x128xf32>
    %cst_57 = arith.constant 0.000000e+00 : f32
    %94 = vector.broadcast %cst_57 : f32 to vector<48x128xf32>
    %95 = arith.maximumf %93, %94 : vector<48x128xf32>
    %c2_i32_58 = arith.constant 2 : i32
    %96 = vector.broadcast %c2_i32_58 : i32 to vector<48x128xi32>
    %97 = arith.cmpi sge, %9, %96 : vector<48x128xi32>
    %c16_i32_59 = arith.constant 16 : i32
    %98 = vector.broadcast %c16_i32_59 : i32 to vector<48x128xi32>
    %99 = arith.cmpi slt, %9, %98 : vector<48x128xi32>
    %100 = arith.andi %97, %99 : vector<48x128xi1>
    %cst_60 = arith.constant 0.000000e+00 : f32
    %101 = vector.broadcast %cst_60 : f32 to vector<48x128xf32>
    %102 = arith.select %100, %95, %101 : vector<48x128xi1>, vector<48x128xf32>
    %103 = tpu.concatenate %102, %12 in 0 : vector<48x128xf32>, vector<8x128xf32> -> vector<56x128xf32>
    %c0_61 = arith.constant 0 : index
    %c0_62 = arith.constant 0 : index
    %104 = vector.load %arg8[%c0_61, %c0_62] : memref<56x128xf32, #tpu.memory_space<vmem>>, vector<56x128xf32>
    tpu.vector_store %arg8[%c0_61, %c0_62], %103 {strides = array<i32>} : memref<56x128xf32, #tpu.memory_space<vmem>>, vector<56x128xf32>,
    %c0_63 = arith.constant 0 : index
    %c0_64 = arith.constant 0 : index
    %105 = vector.load %arg8[%c0_63, %c0_64] : memref<56x128xf32, #tpu.memory_space<vmem>>, vector<56x128xf32>
    %106 = arith.truncf %105 : vector<56x128xf32> to vector<56x128xbf16>
    %cst_65 = arith.constant 0.000000e+00 : f32
    %107 = vector.broadcast %cst_65 : f32 to vector<48x128xf32>
    %c1_66 = arith.constant 1 : index
    %c0_67 = arith.constant 0 : index
    %c0_68 = arith.constant 0 : index
    %c0_69 = arith.constant 0 : index
    %108 = vector.load %arg3[%c1_66, %c0_67, %c0_68, %c0_69] : memref<2x3x128x128xbf16, #tpu.memory_space<vmem>>, vector<1x1x128x128xbf16>
    %109 = vector.shape_cast %108 : vector<1x1x128x128xbf16> to vector<128x128xbf16>
    %110 = vector.extract_strided_slice %106 {offsets = [0, 0], sizes = [48, 128], strides = [1, 1]} : vector<56x128xbf16> to vector<48x128xbf16>
    %cst_70 = arith.constant dense<0.000000e+00> : vector<48x128xf32>
    %111 = tpu.matmul %110, %109, %cst_70 {dimension_numbers = #tpu.dot_dimension_numbers<[1], [0], [0], [1], [0, 0, 1, 1], [], []>} : vector<48x128xbf16>, vector<128x128xbf16>, vector<48x128xf32> -> vector<48x128xf32>
    %112 = arith.addf %107, %111 : vector<48x128xf32>
    %c1_71 = arith.constant 1 : index
    %c1_72 = arith.constant 1 : index
    %c0_73 = arith.constant 0 : index
    %c0_74 = arith.constant 0 : index
    %113 = vector.load %arg3[%c1_71, %c1_72, %c0_73, %c0_74] : memref<2x3x128x128xbf16, #tpu.memory_space<vmem>>, vector<1x1x128x128xbf16>
    %114 = vector.shape_cast %113 : vector<1x1x128x128xbf16> to vector<128x128xbf16>
    %115 = vector.extract_strided_slice %106 {offsets = [1, 0], sizes = [48, 128], strides = [1, 1]} : vector<56x128xbf16> to vector<48x128xbf16>
    %cst_75 = arith.constant dense<0.000000e+00> : vector<48x128xf32>
    %116 = tpu.matmul %115, %114, %cst_75 {dimension_numbers = #tpu.dot_dimension_numbers<[1], [0], [0], [1], [0, 0, 1, 1], [], []>} : vector<48x128xbf16>, vector<128x128xbf16>, vector<48x128xf32> -> vector<48x128xf32>
    %117 = arith.addf %112, %116 : vector<48x128xf32>
    %c1_76 = arith.constant 1 : index
    %c2_77 = arith.constant 2 : index
    %c0_78 = arith.constant 0 : index
    %c0_79 = arith.constant 0 : index
    %118 = vector.load %arg3[%c1_76, %c2_77, %c0_78, %c0_79] : memref<2x3x128x128xbf16, #tpu.memory_space<vmem>>, vector<1x1x128x128xbf16>
    %119 = vector.shape_cast %118 : vector<1x1x128x128xbf16> to vector<128x128xbf16>
    %120 = vector.extract_strided_slice %106 {offsets = [2, 0], sizes = [48, 128], strides = [1, 1]} : vector<56x128xbf16> to vector<48x128xbf16>
    %cst_80 = arith.constant dense<0.000000e+00> : vector<48x128xf32>
    %121 = tpu.matmul %120, %119, %cst_80 {dimension_numbers = #tpu.dot_dimension_numbers<[1], [0], [0], [1], [0, 0, 1, 1], [], []>} : vector<48x128xbf16>, vector<128x128xbf16>, vector<48x128xf32> -> vector<48x128xf32>
    %122 = arith.addf %117, %121 : vector<48x128xf32>
    %c2_81 = arith.constant 2 : index
    %c0_82 = arith.constant 0 : index
    %c0_83 = arith.constant 0 : index
    %123 = vector.load %arg4[%c2_81, %c0_82, %c0_83] : memref<3x1x128xf32, #tpu.memory_space<vmem>>, vector<1x1x128xf32>
    %124 = vector.shape_cast %123 : vector<1x1x128xf32> to vector<1x128xf32>
    %125 = vector.broadcast %124 : vector<1x128xf32> to vector<48x128xf32>
    %126 = arith.addf %122, %125 : vector<48x128xf32>
    %c1_i32_84 = arith.constant 1 : i32
    %127 = vector.broadcast %c1_i32_84 : i32 to vector<48x128xi32>
    %128 = arith.cmpi sge, %9, %127 : vector<48x128xi32>
    %c14_i32_85 = arith.constant 14 : i32
    %129 = vector.broadcast %c14_i32_85 : i32 to vector<48x128xi32>
    %130 = arith.cmpi sle, %9, %129 : vector<48x128xi32>
    %131 = arith.andi %128, %130 : vector<48x128xi1>
    %cst_86 = arith.constant 0.000000e+00 : f32
    %132 = vector.broadcast %cst_86 : f32 to vector<48x128xf32>
    %133 = arith.select %131, %126, %132 : vector<48x128xi1>, vector<48x128xf32>
    %134 = tpu.concatenate %10, %133, %11 in 0 : vector<8x128xf32>, vector<48x128xf32>, vector<8x128xf32> -> vector<64x128xf32>
    %135 = vector.extract_strided_slice %134 {offsets = [6, 0], sizes = [48, 128], strides = [1, 1]} : vector<64x128xf32> to vector<48x128xf32>
    %136 = vector.extract_strided_slice %134 {offsets = [7, 0], sizes = [48, 128], strides = [1, 1]} : vector<64x128xf32> to vector<48x128xf32>
    %137 = arith.maximumf %135, %136 : vector<48x128xf32>
    %138 = vector.extract_strided_slice %134 {offsets = [8, 0], sizes = [48, 128], strides = [1, 1]} : vector<64x128xf32> to vector<48x128xf32>
    %139 = arith.maximumf %137, %138 : vector<48x128xf32>
    %cst_87 = arith.constant 0.000000e+00 : f32
    %140 = vector.broadcast %cst_87 : f32 to vector<48x128xf32>
    %141 = arith.maximumf %139, %140 : vector<48x128xf32>
    %c2_i32_88 = arith.constant 2 : i32
    %142 = vector.broadcast %c2_i32_88 : i32 to vector<48x128xi32>
    %143 = arith.cmpi sge, %9, %142 : vector<48x128xi32>
    %c16_i32_89 = arith.constant 16 : i32
    %144 = vector.broadcast %c16_i32_89 : i32 to vector<48x128xi32>
    %145 = arith.cmpi slt, %9, %144 : vector<48x128xi32>
    %146 = arith.andi %143, %145 : vector<48x128xi1>
    %cst_90 = arith.constant 0.000000e+00 : f32
    %147 = vector.broadcast %cst_90 : f32 to vector<48x128xf32>
    %148 = arith.select %146, %141, %147 : vector<48x128xi1>, vector<48x128xf32>
    %149 = vector.shape_cast %148 : vector<48x128xf32> to vector<1x48x128xf32>
    %c0_91 = arith.constant 0 : index
    %c0_92 = arith.constant 0 : index
    %c0_93 = arith.constant 0 : index
    %150 = vector.load %arg5[%c0_91, %c0_92, %c0_93] : memref<1x48x128xf32, #tpu.memory_space<vmem>>, vector<1x48x128xf32>
    tpu.vector_store %arg5[%c0_91, %c0_92, %c0_93], %149 {strides = array<i32>} : memref<1x48x128xf32, #tpu.memory_space<vmem>>, vector<1x48x128xf32>,
    return
  }
  func.func @transform_0(%arg0: i32) -> (i32, i32, i32) {
    %c0_i32 = arith.constant 0 : i32
    %c0_i32_0 = arith.constant 0 : i32
    %c0_i32_1 = arith.constant 0 : i32
    return %arg0, %c0_i32, %c0_i32_0 : i32, i32, i32
  }
  func.func @transform_1(%arg0: i32) -> (i32, i32, i32) {
    %c0_i32 = arith.constant 0 : i32
    %c0_i32_0 = arith.constant 0 : i32
    %c0_i32_1 = arith.constant 0 : i32
    %c0_i32_2 = arith.constant 0 : i32
    return %c0_i32, %c0_i32_0, %c0_i32_1 : i32, i32, i32
  }
  func.func @transform_2(%arg0: i32) -> (i32, i32, i32, i32) {
    %c0_i32 = arith.constant 0 : i32
    %c0_i32_0 = arith.constant 0 : i32
    %c0_i32_1 = arith.constant 0 : i32
    %c0_i32_2 = arith.constant 0 : i32
    %c0_i32_3 = arith.constant 0 : i32
    return %c0_i32, %c0_i32_0, %c0_i32_1, %c0_i32_2 : i32, i32, i32, i32
  }
  func.func @transform_3(%arg0: i32) -> (i32, i32, i32) {
    %c0_i32 = arith.constant 0 : i32
    %c0_i32_0 = arith.constant 0 : i32
    %c0_i32_1 = arith.constant 0 : i32
    %c0_i32_2 = arith.constant 0 : i32
    return %c0_i32, %c0_i32_0, %c0_i32_1 : i32, i32, i32
  }
  func.func @transform_4(%arg0: i32) -> (i32, i32, i32) {
    %c0_i32 = arith.constant 0 : i32
    %c0_i32_0 = arith.constant 0 : i32
    %c0_i32_1 = arith.constant 0 : i32
    return %arg0, %c0_i32, %c0_i32_0 : i32, i32, i32
  }
}

</mosaic_0001>

<llo_original>
// kernel: _forward_impl.1
$region0: #{_forward_impl.1}
  #allocation0 [shape = 'u32[]', space=smem, size = 0x4, offset = 0x4, fixed_abs, tag = 'smem constant byte address 0x4 - core index']
  #allocation1 [shape = 'u32[144,128]{1,0:T(1,128)}', space=vmem, size = 0x12000, scoped, tag = 'internal scratch']
  #allocation2 [shape = 'f32[56,4]{1,0:T(8,128)}', space=vmem, size = 0x7000, scoped, tag = 'scratch operand']
  #allocation3 [shape = 'f32[56,128]{1,0:T(8,128)}', space=vmem, size = 0x7000, scoped, tag = 'scratch operand']
  #allocation4 [shape = 'f32[56,128]{1,0:T(8,128)}', space=vmem, size = 0x7000, scoped, tag = 'scratch operand']
  %s0 = inlined_call_operand.vmem [shape: f32[4,16,4], index: 0, kind: input, shape index: {}]
  %s1 = inlined_call_operand.vmem [shape: bf16[3,4,128], index: 1, kind: input, shape index: {}]
  %s2 = inlined_call_operand.vmem [shape: bf16[2,3,128,128], index: 2, kind: input, shape index: {}]
  %s3 = inlined_call_operand.vmem [shape: f32[3,1,128], index: 3, kind: input, shape index: {}]
  %s4 = inlined_call_operand.vmem [shape: f32[2,48,128], index: 4, kind: output, shape index: {}]
  %s5 = sld [smem:[#allocation0]]
  $region49: #{_forward_impl.1} parent=0
    _
  %s7 = ssub.s32 1, %s5
  %s8 = scalar_select 0, %s7, %s5
  loop: start=0, step=1, limit=4
  $region2: #{_forward_impl.1} parent=0 // loop_pre_header
    _
  $region3: #{_forward_impl.1} parent=0 // loop_header
    %s10 = sphi 0, %s14
    %p11 = scmp.ge.s32.totalorder %s10, 4
    %s20 = sphi 0, %s22
    %s23 = sphi 0, %s20
    %s24 = sphi 0, %s23
    %s40 = sphi 0, %s24
    %s44 = sphi 0, %s44
    %s46 = sphi 0, %s44
    %s47 = sphi 0, %s46
    %s61 = sphi 0, %s47
    %s65 = sphi 0, %s65
    %s67 = sphi 0, %s65
    %s68 = sphi 0, %s67
    %s82 = sphi 0, %s68
    %s86 = sphi 0, %s86
    %s88 = sphi 0, %s86
    %s89 = sphi 0, %s88
    %s103 = sphi 0, %s89
    %s109 = sphi 0, %s111
    %s112 = sphi 0, %s109
    %s113 = sphi 0, %s112
    %s129 = sphi 0, %s113
  $region4: #{_forward_impl.1} parent=0 // loop_header_branch
    %13 = sbr.rel (%p11) target = $region8
  $region5: #{_forward_impl.1} parent=0 // loop_body
    %s15 = ssub.s32 %s10, 1
    %s16 = ssub.s32 %s10, 2
    %s17 = sadd.s32 %s10, 1
    %s18 = ssub.s32 %s10, %s17
    %p19 = scmp.eq.s32.totalorder %s18, 0
    %s21 = sadd.s32 %s20, 1
    %s22 = scalar_select %p19, %s20, %s21
    %p25 = pneg %p19
    %p26 = scmp.eq.s32.totalorder %s10, 1
    %p27 = por %p25, %p26
    %p28 = scmp.ne.s32.totalorder %s20, %s23
    %p29 = scmp.eq.s32.totalorder %s10, 0
    %p30 = por %p28, %p29
    %p31 = scmp.ne.s32.totalorder %s20, %s23
    %p32 = scmp.eq.s32.totalorder %s15, 1
    %p33 = por %p31, %p32
    %p34 = scmp.ne.s32.totalorder %s23, %s24
    %p35 = scmp.eq.s32.totalorder %s15, 0
    %p36 = por %p34, %p35
    %p37 = scmp.ne.s32.totalorder %s23, %s24
    %p38 = scmp.eq.s32.totalorder %s16, 1
    %p39 = por %p37, %p38
    %p41 = scmp.ne.s32.totalorder %s24, %s40
    %p42 = scmp.eq.s32.totalorder %s16, 0
    %p43 = por %p41, %p42
    %s45 = sadd.s32 %s44, 1
    %p48 = scmp.eq.s32.totalorder %s10, 1
    %p49 = scmp.ne.s32.totalorder %s44, %s46
    %p50 = scmp.eq.s32.totalorder %s10, 0
    %p51 = por %p49, %p50
    %p52 = scmp.ne.s32.totalorder %s44, %s46
    %p53 = scmp.eq.s32.totalorder %s15, 1
    %p54 = por %p52, %p53
    %p55 = scmp.ne.s32.totalorder %s46, %s47
    %p56 = scmp.eq.s32.totalorder %s15, 0
    %p57 = por %p55, %p56
    %p58 = scmp.ne.s32.totalorder %s46, %s47
    %p59 = scmp.eq.s32.totalorder %s16, 1
    %p60 = por %p58, %p59
    %p62 = scmp.ne.s32.totalorder %s47, %s61
    %p63 = scmp.eq.s32.totalorder %s16, 0
    %p64 = por %p62, %p63
    %s66 = sadd.s32 %s65, 1
    %p69 = scmp.eq.s32.totalorder %s10, 1
    %p70 = scmp.ne.s32.totalorder %s65, %s67
    %p71 = scmp.eq.s32.totalorder %s10, 0
    %p72 = por %p70, %p71
    %p73 = scmp.ne.s32.totalorder %s65, %s67
    %p74 = scmp.eq.s32.totalorder %s15, 1
    %p75 = por %p73, %p74
    %p76 = scmp.ne.s32.totalorder %s67, %s68
    %p77 = scmp.eq.s32.totalorder %s15, 0
    %p78 = por %p76, %p77
    %p79 = scmp.ne.s32.totalorder %s67, %s68
    %p80 = scmp.eq.s32.totalorder %s16, 1
    %p81 = por %p79, %p80
    %p83 = scmp.ne.s32.totalorder %s68, %s82
    %p84 = scmp.eq.s32.totalorder %s16, 0
    %p85 = por %p83, %p84
    %s87 = sadd.s32 %s86, 1
    %p90 = scmp.eq.s32.totalorder %s10, 1
    %p91 = scmp.ne.s32.totalorder %s86, %s88
    %p92 = scmp.eq.s32.totalorder %s10, 0
    %p93 = por %p91, %p92
    %p94 = scmp.ne.s32.totalorder %s86, %s88
    %p95 = scmp.eq.s32.totalorder %s15, 1
    %p96 = por %p94, %p95
    %p97 = scmp.ne.s32.totalorder %s88, %s89
    %p98 = scmp.eq.s32.totalorder %s15, 0
    %p99 = por %p97, %p98
    %p100 = scmp.ne.s32.totalorder %s88, %s89
    %p101 = scmp.eq.s32.totalorder %s16, 1
    %p102 = por %p100, %p101
    %p104 = scmp.ne.s32.totalorder %s89, %s103
    %p105 = scmp.eq.s32.totalorder %s16, 0
    %p106 = por %p104, %p105
    %s107 = ssub.s32 %s10, %s17
    %p108 = scmp.eq.s32.totalorder %s107, 0
    %s110 = sadd.s32 %s109, 1
    %s111 = scalar_select %p108, %s109, %s110
    %p114 = pneg %p108
    %p115 = scmp.eq.s32.totalorder %s10, 1
    %p116 = por %p114, %p115
    %p117 = scmp.ne.s32.totalorder %s109, %s112
    %p118 = scmp.eq.s32.totalorder %s10, 0
    %p119 = por %p117, %p118
    %p120 = scmp.ne.s32.totalorder %s109, %s112
    %p121 = scmp.eq.s32.totalorder %s15, 1
    %p122 = por %p120, %p121
    %p123 = scmp.ne.s32.totalorder %s112, %s113
    %p124 = scmp.eq.s32.totalorder %s15, 0
    %p125 = por %p123, %p124
    %p126 = scmp.ne.s32.totalorder %s112, %s113
    %p127 = scmp.eq.s32.totalorder %s16, 1
    %p128 = por %p126, %p127
    %p130 = scmp.ne.s32.totalorder %s113, %s129
    %p131 = scmp.eq.s32.totalorder %s16, 0
    %p132 = por %p130, %p131
    %p133 = scmp.le.s32.totalorder 1, %s10
    %p134 = scmp.lt.s32.totalorder %s10, 3
    %p135 = pnand %p133, %p134
    %p136 = pneg %p135
    // Predicated region
    $region9: #{_forward_impl.1} parent=5 // pred_check
      _
    $region10: #{_forward_impl.1} parent=5 // pred_check_branch
      %138 = sbr.rel (%p135) target = $region12
    $region11: #{_forward_impl.1} parent=5 // pred_region
      %s139 = ssub.s32 %s10, 1
      // Predicated region
      $region13: #{_forward_impl.1} parent=11 // pred_check
        %p140 = pneg %p57
      $region14: #{_forward_impl.1} parent=11 // pred_check_branch
        %142 = sbr.rel (%p140) target = $region16
      $region15: #{_forward_impl.1} parent=11 // pred_region
        _
      $region16: #{_forward_impl.1} parent=11 // pred_fallthru
        _
      // Predicated region
      $region17: #{_forward_impl.1} parent=11 // pred_check
        %p143 = pneg %p78
      $region18: #{_forward_impl.1} parent=11 // pred_check_branch
        %145 = sbr.rel (%p143) target = $region20
      $region19: #{_forward_impl.1} parent=11 // pred_region
        _
      $region20: #{_forward_impl.1} parent=11 // pred_fallthru
        _
      // Predicated region
      $region21: #{_forward_impl.1} parent=11 // pred_check
        %p146 = pneg %p99
      $region22: #{_forward_impl.1} parent=11 // pred_check_branch
        %148 = sbr.rel (%p146) target = $region24
      $region23: #{_forward_impl.1} parent=11 // pred_region
        _
      $region24: #{_forward_impl.1} parent=11 // pred_fallthru
        _
    $region12: #{_forward_impl.1} parent=5 // pred_fallthru
      _
    %p149 = scmp.lt.s32.totalorder %s10, 2
    // Predicated region
    $region25: #{_forward_impl.1} parent=5 // pred_check
      %p150 = pneg %p149
    $region26: #{_forward_impl.1} parent=5 // pred_check_branch
      %152 = sbr.rel (%p150) target = $region28
    $region27: #{_forward_impl.1} parent=5 // pred_region
      // Predicated region
      $region29: #{_forward_impl.1} parent=27 // pred_check
        %p153 = pneg %p30
      $region30: #{_forward_impl.1} parent=27 // pred_check_branch
        %155 = sbr.rel (%p153) target = $region32
      $region31: #{_forward_impl.1} parent=27 // pred_region
        %s156 = smul.u32 2, %s10
        %p157 = scmp.lt.s32.totalorder %s156, 3
        %s158 = scalar_select %p157, %s156, 3
        %s159 = smul.addr %s158, 2
        %s160 = smul.addr %s159, 8
        %s161 = scalar_lea.vmem %s0, %s160
        %s162 = smul.u32 2, %s10
      $region32: #{_forward_impl.1} parent=27 // pred_fallthru
        _
    $region28: #{_forward_impl.1} parent=5 // pred_fallthru
      _
    %p163 = scmp.le.s32.totalorder 1, %s10
    %p164 = scmp.lt.s32.totalorder %s10, 3
    %p165 = pnand %p163, %p164
    %p166 = pneg %p165
    // Predicated region
    $region33: #{_forward_impl.1} parent=5 // pred_check
      _
    $region34: #{_forward_impl.1} parent=5 // pred_check_branch
      %168 = sbr.rel (%p165) target = $region36
    $region35: #{_forward_impl.1} parent=5 // pred_region
      %s169 = ssub.s32 %s10, 1
      %s170 = smul.u32 2, %s15
      %p171 = scmp.lt.s32.totalorder %s170, 3
      %s172 = scalar_select %p171, %s170, 3
      %s173 = smul.addr %s172, 2
      %s174 = smul.addr %s173, 8
      %s175 = scalar_lea.vmem %s0, %s174
      %p176 = pneg %p36
      %p177 = pneg %p33
      %p178 = pneg %p57
      %p179 = pneg %p54
      %p180 = pneg %p78
      %p181 = pneg %p75
      %p182 = pneg %p99
      %p183 = pneg %p96
      %p184 = pneg %p125
      %p185 = pneg %p122
      %p186 = scmp.lt.s32.totalorder %s15, 1
      %s187 = scalar_select %p186, %s15, 1
      %s188 = smul.addr %s187, 6
      %s189 = smul.addr %s188, 8
      %s190 = scalar_lea.vmem %s4, %s189
      %s191 = smul.u32 2, %s15
      %p192 = scmp.lt.s32.totalorder %s191, 3
      %s193 = scalar_select %p192, %s191, 3
      %s194 = smul.addr %s193, 2
      %s195 = smul.addr %s194, 8
      %s196 = scalar_lea.vmem %s0, %s195
      %s197 = smul.u32 2, %s15
      %p198 = scmp.lt.s32.totalorder %s15, 1
      %s199 = scalar_select %p198, %s15, 1
      %s200 = smul.addr %s199, 6
      %s201 = smul.addr %s200, 8
      %s202 = scalar_lea.vmem %s4, %s201
      %vm204 = vcmask 31744
      %205 = vst.msk [vmem:[#allocation2] sm:$0xff] %vm204, 0.0
      %206 = vst.msk [vmem:[#allocation2 + $0x8] sm:$0xff] %vm204, 0.0
      %207 = vst.msk [vmem:[#allocation2 + $0x10] sm:$0xff] %vm204, 0.0
      %208 = vst.msk [vmem:[#allocation2 + $0x18] sm:$0xff] %vm204, 0.0
      %209 = vst.msk [vmem:[#allocation2 + $0x20] sm:$0xff] %vm204, 0.0
      %210 = vst.msk [vmem:[#allocation2 + $0x28] sm:$0xff] %vm204, 0.0
      %211 = vst.msk [vmem:[#allocation2 + $0x30] sm:$0xff] %vm204, 0.0
      %v212 = vld [vmem:[%s196] sm:$0xff]
      %v213 = vld [vmem:[%s196 + $0x8] sm:$0xff]
      %214 = vst.msk [vmem:[#allocation2 + $0x2] sm:$0xff] %vm204, %v212
      %215 = vst.msk [vmem:[#allocation2 + $0xa] sm:$0xff] %vm204, %v213
      %s216 = scalar_lea.vmem %s196, 16
      %v217 = vld [vmem:[%s216] sm:$0xff]
      %v218 = vld [vmem:[%s216 + $0x8] sm:$0xff]
      %219 = vst.msk [vmem:[#allocation2 + $0x1a] sm:$0xff] %vm204, %v217
      %220 = vst.msk [vmem:[#allocation2 + $0x22] sm:$0xff] %vm204, %v218
      %v221 = vlaneseq
      %v222 = vshrl.u32 %v221, 7
      %v223 = vadd.s32 %v222, 8
      %v224 = vadd.s32 %v222, 16
      %v225 = vld [vmem:[#allocation2] sm:$0xff]
      %v226 = vld [vmem:[#allocation2 + $0x8] sm:$0xff]
      %v227 = vld [vmem:[#allocation2 + $0x10] sm:$0xff]
      %v228 = vld [vmem:[#allocation2 + $0x18] sm:$0xff]
      %v229 = vld [vmem:[#allocation2 + $0x20] sm:$0xff]
      %v230 = vld [vmem:[#allocation2 + $0x28] sm:$0xff]
      %v231 = vld [vmem:[#allocation2 + $0x30] sm:$0xff]
      %v232 = vpack.c.bf16 %v226, %v225
      %v233 = vpack.c.bf16 %v228, %v227
      %v234 = vpack.c.bf16 %v230, %v229
      %v235 = vpack.c.bf16 %v231, %v231
      %v236 = vld [vmem:[%s1] sm:$0x3]
      %s237 = scalar_lea.vmem %s1, 2
      %v238 = vld [vmem:[%s237] sm:$0x3]
      %vm239 = vsmask.f32 7424
      %v241 = vshrl.u32 %v232, 16
      %v243 = vshll.u32 %v232, 16
      %v245 = vrot.slane %v243, 1
      %v246 = vor.u32 %v241, %v245
      %v248 = vshll.u32 %v233, 16
      %v250 = vrot.slane %v248, 1
      %v251 = vsel %vm239, %v246, %v250
      %v252 = vshrl.u32 %v233, 16
      %v254 = vor.u32 %v252, %v250
      %v256 = vshll.u32 %v234, 16
      %v258 = vrot.slane %v256, 1
      %v259 = vsel %vm239, %v254, %v258
      %v260 = vshrl.u32 %v234, 16
      %v262 = vor.u32 %v260, %v258
      %v264 = vshll.u32 %v235, 16
      %v266 = vrot.slane %v264, 1
      %v267 = vsel %vm239, %v262, %v266
      %v269 = vsel %vm204, %v251, 0
      %v272 = vsel %vm204, %v259, 0
      %v275 = vsel %vm204, %v267, 0
      %vm277 = vcmask 1041408
      %v279 = vsel %vm277, %v238, 0
      %281 = vmatprep.subr.bf16.mxu0 0
      %282 = vmatpush1.bf16.msra.mxu0 %v279
      %283 = vmatprep.subr.bf16.mxu0 0
      %284 = vmatpush1.bf16.msra.mxu0 0
      %285 = vmatprep.subr.bf16.mxu0 0
      %286 = vmatpush1.bf16.msra.mxu0 0
      %287 = vmatprep.subr.bf16.mxu0 0
      %288 = vmatpush1.bf16.msra.mxu0 0
      %289 = vmatprep.subr.bf16.mxu0 0
      %290 = vmatpush1.bf16.msra.mxu0 0
      %291 = vmatprep.subr.bf16.mxu0 0
      %292 = vmatpush1.bf16.msra.mxu0 0
      %293 = vmatprep.subr.bf16.mxu0 0
      %294 = vmatpush1.bf16.msra.mxu0 0
      %295 = vmatprep.subr.bf16.mxu0 0
      %296 = vmatpush1.bf16.msra.mxu0 0
      %297 = vmatprep.subr.bf16.mxu0 0
      %298 = vmatpush1.bf16.msra.mxu0 0
      %299 = vmatprep.subr.bf16.mxu0 0
      %300 = vmatpush1.bf16.msra.mxu0 0
      %301 = vmatprep.subr.bf16.mxu0 0
      %302 = vmatpush1.bf16.msra.mxu0 0
      %303 = vmatprep.subr.bf16.mxu0 0
      %304 = vmatpush1.bf16.msra.mxu0 0
      %305 = vmatprep.subr.bf16.mxu0 0
      %306 = vmatpush1.bf16.msra.mxu0 0
      %307 = vmatprep.subr.bf16.mxu0 0
      %308 = vmatpush1.bf16.msra.mxu0 0
      %309 = vmatprep.subr.bf16.mxu0 0
      %310 = vmatpush1.bf16.msra.mxu0 0
      %311 = vmatprep.subr.bf16.mxu0 0
      %312 = vmatpush1.bf16.msra.mxu0 0
      %313 = vmatprep.mubr.bf16.mxu0 0
      %314 = vmatmul.mubr.bf16.gmra.mrb[0].mxu0 %v269
      %v315 = vpop.f32.mrb[0].mxu0
      %v316 = vadd.f32 0.0, %v315
      %v317 = vpop.f32.mrb[0].mxu0
      %v318 = vpop.f32.mrb[0].mxu0
      %v319 = vadd.f32 0.0, %v318
      %v320 = vpop.f32.mrb[0].mxu0
      %321 = vmatprep.mubr.bf16.mxu0 0
      %322 = vmatmul.mubr.bf16.gmra.mrb[0].mxu0 %v272
      %v323 = vpop.f32.mrb[0].mxu0
      %v324 = vadd.f32 0.0, %v323
      %v325 = vpop.f32.mrb[0].mxu0
      %v326 = vpop.f32.mrb[0].mxu0
      %v327 = vadd.f32 0.0, %v326
      %v328 = vpop.f32.mrb[0].mxu0
      %329 = vmatprep.mubr.bf16.mxu0 0
      %330 = vmatmul.mubr.bf16.gmra.mrb[0].mxu0 %v275
      %v331 = vpop.f32.mrb[0].mxu0
      %v332 = vadd.f32 0.0, %v331
      %v333 = vpop.f32.mrb[0].mxu0
      %v334 = vpop.f32.mrb[0].mxu0
      %v335 = vadd.f32 0.0, %v334
      %v336 = vpop.f32.mrb[0].mxu0
      %337 = vdwg.mxu0
      %v338 = vsel %vm204, %v232, 0
      %v340 = vsel %vm204, %v233, 0
      %v342 = vsel %vm204, %v234, 0
      %v345 = vsel %vm277, %v236, 0
      %347 = vmatprep.subr.bf16.mxu0 0
      %348 = vmatpush1.bf16.msra.mxu0 %v345
      %349 = vmatprep.subr.bf16.mxu0 0
      %350 = vmatpush1.bf16.msra.mxu0 0
      %351 = vmatprep.subr.bf16.mxu0 0
      %352 = vmatpush1.bf16.msra.mxu0 0
      %353 = vmatprep.subr.bf16.mxu0 0
      %354 = vmatpush1.bf16.msra.mxu0 0
      %355 = vmatprep.subr.bf16.mxu0 0
      %356 = vmatpush1.bf16.msra.mxu0 0
      %357 = vmatprep.subr.bf16.mxu0 0
      %358 = vmatpush1.bf16.msra.mxu0 0
      %359 = vmatprep.subr.bf16.mxu0 0
      %360 = vmatpush1.bf16.msra.mxu0 0
      %361 = vmatprep.subr.bf16.mxu0 0
      %362 = vmatpush1.bf16.msra.mxu0 0
      %363 = vmatprep.subr.bf16.mxu0 0
      %364 = vmatpush1.bf16.msra.mxu0 0
      %365 = vmatprep.subr.bf16.mxu0 0
      %366 = vmatpush1.bf16.msra.mxu0 0
      %367 = vmatprep.subr.bf16.mxu0 0
      %368 = vmatpush1.bf16.msra.mxu0 0
      %369 = vmatprep.subr.bf16.mxu0 0
      %370 = vmatpush1.bf16.msra.mxu0 0
      %371 = vmatprep.subr.bf16.mxu0 0
      %372 = vmatpush1.bf16.msra.mxu0 0
      %373 = vmatprep.subr.bf16.mxu0 0
      %374 = vmatpush1.bf16.msra.mxu0 0
      %375 = vmatprep.subr.bf16.mxu0 0
      %376 = vmatpush1.bf16.msra.mxu0 0
      %377 = vmatprep.subr.bf16.mxu0 0
      %378 = vmatpush1.bf16.msra.mxu0 0
      %379 = vmatprep.mubr.bf16.mxu0 0
      %380 = vmatmul.mubr.bf16.gmra.mrb[0].mxu0 %v338
      %v381 = vpop.f32.mrb[0].mxu0
      %v382 = vadd.f32 %v316, %v381
      %v383 = vpop.f32.mrb[0].mxu0
      %v384 = vpop.f32.mrb[0].mxu0
      %v385 = vadd.f32 %v319, %v384
      %v386 = vpop.f32.mrb[0].mxu0
      %387 = vmatprep.mubr.bf16.mxu0 0
      %388 = vmatmul.mubr.bf16.gmra.mrb[0].mxu0 %v340
      %v389 = vpop.f32.mrb[0].mxu0
      %v390 = vadd.f32 %v324, %v389
      %v391 = vpop.f32.mrb[0].mxu0
      %v392 = vpop.f32.mrb[0].mxu0
      %v393 = vadd.f32 %v327, %v392
      %v394 = vpop.f32.mrb[0].mxu0
      %395 = vmatprep.mubr.bf16.mxu0 0
      %396 = vmatmul.mubr.bf16.gmra.mrb[0].mxu0 %v342
      %v397 = vpop.f32.mrb[0].mxu0
      %v398 = vadd.f32 %v332, %v397
      %v399 = vpop.f32.mrb[0].mxu0
      %v400 = vpop.f32.mrb[0].mxu0
      %v401 = vadd.f32 %v335, %v400
      %v402 = vpop.f32.mrb[0].mxu0
      %403 = vdwg.mxu0
      %s404 = scalar_lea.vmem %s1, 4
      %v405 = vld [vmem:[%s404] sm:$0x3]
      %vm410 = vcmask 1046528
      %v411 = vrot.slane %v232, 1
      %v412 = vrot.slane %v233, 1
      %v413 = vsel %vm410, %v411, %v412
      %v414 = vrot.slane %v234, 1
      %v415 = vsel %vm410, %v412, %v414
      %v416 = vrot.slane %v235, 1
      %v417 = vsel %vm410, %v414, %v416
      %v419 = vsel %vm204, %v413, 0
      %v422 = vsel %vm204, %v415, 0
      %v425 = vsel %vm204, %v417, 0
      %v428 = vsel %vm277, %v405, 0
      %430 = vmatprep.subr.bf16.mxu0 0
      %431 = vmatpush1.bf16.msra.mxu0 %v428
      %432 = vmatprep.subr.bf16.mxu0 0
      %433 = vmatpush1.bf16.msra.mxu0 0
      %434 = vmatprep.subr.bf16.mxu0 0
      %435 = vmatpush1.bf16.msra.mxu0 0
      %436 = vmatprep.subr.bf16.mxu0 0
      %437 = vmatpush1.bf16.msra.mxu0 0
      %438 = vmatprep.subr.bf16.mxu0 0
      %439 = vmatpush1.bf16.msra.mxu0 0
      %440 = vmatprep.subr.bf16.mxu0 0
      %441 = vmatpush1.bf16.msra.mxu0 0
      %442 = vmatprep.subr.bf16.mxu0 0
      %443 = vmatpush1.bf16.msra.mxu0 0
      %444 = vmatprep.subr.bf16.mxu0 0
      %445 = vmatpush1.bf16.msra.mxu0 0
      %446 = vmatprep.subr.bf16.mxu0 0
      %447 = vmatpush1.bf16.msra.mxu0 0
      %448 = vmatprep.subr.bf16.mxu0 0
      %449 = vmatpush1.bf16.msra.mxu0 0
      %450 = vmatprep.subr.bf16.mxu0 0
      %451 = vmatpush1.bf16.msra.mxu0 0
      %452 = vmatprep.subr.bf16.mxu0 0
      %453 = vmatpush1.bf16.msra.mxu0 0
      %454 = vmatprep.subr.bf16.mxu0 0
      %455 = vmatpush1.bf16.msra.mxu0 0
      %456 = vmatprep.subr.bf16.mxu0 0
      %457 = vmatpush1.bf16.msra.mxu0 0
      %458 = vmatprep.subr.bf16.mxu0 0
      %459 = vmatpush1.bf16.msra.mxu0 0
      %460 = vmatprep.subr.bf16.mxu0 0
      %461 = vmatpush1.bf16.msra.mxu0 0
      %462 = vmatprep.mubr.bf16.mxu0 0
      %463 = vmatmul.mubr.bf16.gmra.mrb[0].mxu0 %v419
      %v464 = vpop.f32.mrb[0].mxu0
      %v465 = vadd.f32 0.0, %v464
      %v466 = vpop.f32.mrb[0].mxu0
      %v467 = vpop.f32.mrb[0].mxu0
      %v468 = vadd.f32 0.0, %v467
      %v469 = vpop.f32.mrb[0].mxu0
      %470 = vmatprep.mubr.bf16.mxu0 0
      %471 = vmatmul.mubr.bf16.gmra.mrb[0].mxu0 %v422
      %v472 = vpop.f32.mrb[0].mxu0
      %v473 = vadd.f32 0.0, %v472
      %v474 = vpop.f32.mrb[0].mxu0
      %v475 = vpop.f32.mrb[0].mxu0
      %v476 = vadd.f32 0.0, %v475
      %v477 = vpop.f32.mrb[0].mxu0
      %478 = vmatprep.mubr.bf16.mxu0 0
      %479 = vmatmul.mubr.bf16.gmra.mrb[0].mxu0 %v425
      %v480 = vpop.f32.mrb[0].mxu0
      %v481 = vadd.f32 0.0, %v480
      %v482 = vpop.f32.mrb[0].mxu0
      %v483 = vpop.f32.mrb[0].mxu0
      %v484 = vadd.f32 0.0, %v483
      %v485 = vpop.f32.mrb[0].mxu0
      %486 = vdwg.mxu0
      %v487 = vadd.f32 %v382, %v465
      %v488 = vadd.f32 %v385, %v468
      %v489 = vadd.f32 %v390, %v473
      %v490 = vadd.f32 %v393, %v476
      %v491 = vadd.f32 %v398, %v481
      %v492 = vadd.f32 %v401, %v484
      %v493 = vld [vmem:[%s3] sm:$0x1]
      %v495 = vlaneseq
      %v496 = vshrl.u32 %v495, 7
      %v497 = vsub.s32 0, %v496
      %v498 = vrot.slane %v493, %v497
      %v500 = vadd.f32 %v487, %v498
      %v501 = vadd.f32 %v488, %v498
      %v502 = vadd.f32 %v489, %v498
      %v503 = vadd.f32 %v490, %v498
      %v504 = vadd.f32 %v491, %v498
      %v505 = vadd.f32 %v492, %v498
      %vm506 = vcmp.ge.s32.totalorder %v222, 2
      %vm507 = vcmp.ge.s32.totalorder %v223, 2
      %vm508 = vcmp.ge.s32.totalorder %v224, 2
      %vm509 = vcmp.le.s32.totalorder %v222, 15
      %vm510 = vcmp.le.s32.totalorder %v223, 15
      %vm511 = vcmp.le.s32.totalorder %v224, 15
      %vm512 = vmand %vm506, %vm509
      %vm513 = vmand %vm507, %vm510
      %vm514 = vmand %vm508, %vm511
      %v515 = vsel %vm512, %v500, 0.0
      %v516 = vsel %vm513, %v501, 0.0
      %v517 = vsel %vm514, %v502, 0.0
      %v518 = vsel %vm512, %v503, 0.0
      %v519 = vsel %vm513, %v504, 0.0
      %v520 = vsel %vm514, %v505, 0.0
      %vm527 = vcmask 1046528
      %v528 = vrot.slane %v515, 1
      %v529 = vrot.slane %v516, 1
      %v530 = vsel %vm527, %v528, %v529
      %v531 = vrot.slane %v517, 1
      %v532 = vsel %vm527, %v529, %v531
      %v533 = vrot.slane %v518, 1
      %v534 = vsel %vm527, %v531, %v533
      %v535 = vrot.slane %v519, 1
      %v536 = vsel %vm527, %v533, %v535
      %v537 = vrot.slane %v520, 1
      %v538 = vsel %vm527, %v535, %v537
      %v546 = vmax.f32 %v528, 0.0
      %v547 = vmax.f32 %v515, %v530
      %v548 = vmax.f32 %v516, %v532
      %v549 = vmax.f32 %v517, %v534
      %v550 = vmax.f32 %v518, %v536
      %v551 = vmax.f32 %v519, %v538
      %v552 = vmax.f32 %v520, %v537
      %vm554 = vcmask 1045504
      %v555 = vrot.slane %v515, 2
      %v556 = vrot.slane %v516, 2
      %v557 = vsel %vm554, %v555, %v556
      %v558 = vrot.slane %v517, 2
      %v559 = vsel %vm554, %v556, %v558
      %v560 = vrot.slane %v518, 2
      %v561 = vsel %vm554, %v558, %v560
      %v562 = vrot.slane %v519, 2
      %v563 = vsel %vm554, %v560, %v562
      %v564 = vrot.slane %v520, 2
      %v565 = vsel %vm554, %v562, %v564
      %v566 = vrot.slane 0.0, 2
      %v567 = vsel %vm554, %v564, %v566
      %v575 = vmax.f32 %v546, %v555
      %v576 = vmax.f32 %v547, %v557
      %v577 = vmax.f32 %v548, %v559
      %v578 = vmax.f32 %v549, %v561
      %v579 = vmax.f32 %v550, %v563
      %v580 = vmax.f32 %v551, %v565
      %v581 = vmax.f32 %v552, %v567
      %v582 = vmax.f32 %v575, 0.0
      %v583 = vmax.f32 %v576, 0.0
      %v584 = vmax.f32 %v577, 0.0
      %v585 = vmax.f32 %v578, 0.0
      %v586 = vmax.f32 %v579, 0.0
      %v587 = vmax.f32 %v580, 0.0
      %v588 = vmax.f32 %v581, 0.0
      %vm589 = vcmp.lt.s32.totalorder %v222, 16
      %vm590 = vcmp.lt.s32.totalorder %v223, 16
      %vm591 = vcmp.lt.s32.totalorder %v224, 16
      %vm592 = vmand %vm506, %vm589
      %vm593 = vmand %vm507, %vm590
      %vm594 = vmand %vm508, %vm591
      %vm602 = vcmask 1040384
      %v603 = vrot.slane %v582, 7
      %v604 = vrot.slane %v583, 7
      %v605 = vsel %vm602, %v603, %v604
      %v606 = vrot.slane %v584, 7
      %v607 = vsel %vm602, %v604, %v606
      %v608 = vrot.slane %v585, 7
      %v609 = vsel %vm602, %v606, %v608
      %v610 = vrot.slane %v586, 7
      %v611 = vsel %vm602, %v608, %v610
      %v612 = vrot.slane %v587, 7
      %v613 = vsel %vm602, %v610, %v612
      %v614 = vrot.slane %v588, 7
      %v615 = vsel %vm602, %v612, %v614
      %v622 = vsel %vm592, %v605, 0.0
      %v623 = vsel %vm593, %v607, 0.0
      %v624 = vsel %vm594, %v609, 0.0
      %v625 = vsel %vm592, %v611, 0.0
      %v626 = vsel %vm593, %v613, 0.0
      %v627 = vsel %vm594, %v615, 0.0
      %628 = vst [vmem:[#allocation3] sm:$0xff] %v622
      %629 = vst [vmem:[#allocation3 + $0x8] sm:$0xff] %v623
      %630 = vst [vmem:[#allocation3 + $0x10] sm:$0xff] %v624
      %631 = vst [vmem:[#allocation3 + $0x18] sm:$0xff] %v625
      %632 = vst [vmem:[#allocation3 + $0x20] sm:$0xff] %v626
      %633 = vst [vmem:[#allocation3 + $0x28] sm:$0xff] %v627
      %634 = vst [vmem:[#allocation3 + $0x30] sm:$0xff] 0.0
      %v635 = vld [vmem:[#allocation3] sm:$0xff]
      %v636 = vld [vmem:[#allocation3 + $0x8] sm:$0xff]
      %v637 = vld [vmem:[#allocation3 + $0x10] sm:$0xff]
      %v638 = vld [vmem:[#allocation3 + $0x18] sm:$0xff]
      %v639 = vld [vmem:[#allocation3 + $0x20] sm:$0xff]
      %v640 = vld [vmem:[#allocation3 + $0x28] sm:$0xff]
      %v641 = vld [vmem:[#allocation3 + $0x30] sm:$0xff]
      %v642 = vpack.c.bf16 %v636, %v635
      %v643 = vpack.c.bf16 %v638, %v637
      %v644 = vpack.c.bf16 %v640, %v639
      %v645 = vpack.c.bf16 %v641, %v641
      %v646 = vld [vmem:[%s2] sm:$0xf]
      %v647 = vld [vmem:[%s2 + $0x4] sm:$0xf]
      %v648 = vld [vmem:[%s2 + $0x8] sm:$0xf]
      %v649 = vld [vmem:[%s2 + $0xc] sm:$0xf]
      %v650 = vld [vmem:[%s2 + $0x10] sm:$0xf]
      %v651 = vld [vmem:[%s2 + $0x14] sm:$0xf]
      %v652 = vld [vmem:[%s2 + $0x18] sm:$0xf]
      %v653 = vld [vmem:[%s2 + $0x1c] sm:$0xf]
      %v654 = vld [vmem:[%s2 + $0x20] sm:$0xf]
      %v655 = vld [vmem:[%s2 + $0x24] sm:$0xf]
      %v656 = vld [vmem:[%s2 + $0x28] sm:$0xf]
      %v657 = vld [vmem:[%s2 + $0x2c] sm:$0xf]
      %v658 = vld [vmem:[%s2 + $0x30] sm:$0xf]
      %v659 = vld [vmem:[%s2 + $0x34] sm:$0xf]
      %v660 = vld [vmem:[%s2 + $0x38] sm:$0xf]
      %v661 = vld [vmem:[%s2 + $0x3c] sm:$0xf]
      %s662 = scalar_lea.vmem %s2, 64
      %v663 = vld [vmem:[%s662] sm:$0xf]
      %v664 = vld [vmem:[%s662 + $0x4] sm:$0xf]
      %v665 = vld [vmem:[%s662 + $0x8] sm:$0xf]
      %v666 = vld [vmem:[%s662 + $0xc] sm:$0xf]
      %v667 = vld [vmem:[%s662 + $0x10] sm:$0xf]
      %v668 = vld [vmem:[%s662 + $0x14] sm:$0xf]
      %v669 = vld [vmem:[%s662 + $0x18] sm:$0xf]
      %v670 = vld [vmem:[%s662 + $0x1c] sm:$0xf]
      %v671 = vld [vmem:[%s662 + $0x20] sm:$0xf]
      %v672 = vld [vmem:[%s662 + $0x24] sm:$0xf]
      %v673 = vld [vmem:[%s662 + $0x28] sm:$0xf]
      %v674 = vld [vmem:[%s662 + $0x2c] sm:$0xf]
      %v675 = vld [vmem:[%s662 + $0x30] sm:$0xf]
      %v676 = vld [vmem:[%s662 + $0x34] sm:$0xf]
      %v677 = vld [vmem:[%s662 + $0x38] sm:$0xf]
      %v678 = vld [vmem:[%s662 + $0x3c] sm:$0xf]
      %v680 = vshrl.u32 %v642, 16
      %v682 = vshll.u32 %v642, 16
      %v684 = vrot.slane %v682, 1
      %v685 = vor.u32 %v680, %v684
      %v687 = vshll.u32 %v643, 16
      %v689 = vrot.slane %v687, 1
      %v690 = vsel %vm239, %v685, %v689
      %v691 = vshrl.u32 %v643, 16
      %v693 = vor.u32 %v691, %v689
      %v695 = vshll.u32 %v644, 16
      %v697 = vrot.slane %v695, 1
      %v698 = vsel %vm239, %v693, %v697
      %v699 = vshrl.u32 %v644, 16
      %v701 = vor.u32 %v699, %v697
      %v703 = vshll.u32 %v645, 16
      %v705 = vrot.slane %v703, 1
      %v706 = vsel %vm239, %v701, %v705
      %v726 = vunpack.c.l.b16 %v663
      %v727 = vunpack.c.l.b16 %v664
      %v728 = vunpack.c.l.b16 %v665
      %v729 = vunpack.c.l.b16 %v666
      %v730 = vunpack.c.l.b16 %v667
      %v731 = vunpack.c.l.b16 %v668
      %v732 = vunpack.c.l.b16 %v669
      %v733 = vunpack.c.l.b16 %v670
      %v734 = vunpack.c.l.b16 %v671
      %v735 = vunpack.c.l.b16 %v672
      %v736 = vunpack.c.l.b16 %v673
      %v737 = vunpack.c.l.b16 %v674
      %v738 = vunpack.c.l.b16 %v675
      %v739 = vunpack.c.l.b16 %v676
      %v740 = vunpack.c.l.b16 %v677
      %v741 = vunpack.c.l.b16 %v678
      %v742 = vpack.c.b16 %v727, %v726
      %v743 = vpack.c.b16 %v729, %v728
      %v744 = vpack.c.b16 %v731, %v730
      %v745 = vpack.c.b16 %v733, %v732
      %v746 = vpack.c.b16 %v735, %v734
      %v747 = vpack.c.b16 %v737, %v736
      %v748 = vpack.c.b16 %v739, %v738
      %v749 = vpack.c.b16 %v741, %v740
      %758 = vmatprep.subr.bf16.mxu0 0
      %759 = vmatpush1.bf16.msra.mxu0 %v742
      %760 = vmatprep.subr.bf16.mxu0 0
      %761 = vmatpush1.bf16.msra.mxu0 %v743
      %762 = vmatprep.subr.bf16.mxu0 0
      %763 = vmatpush1.bf16.msra.mxu0 %v744
      %764 = vmatprep.subr.bf16.mxu0 0
      %765 = vmatpush1.bf16.msra.mxu0 %v745
      %766 = vmatprep.subr.bf16.mxu0 0
      %767 = vmatpush1.bf16.msra.mxu0 %v746
      %768 = vmatprep.subr.bf16.mxu0 0
      %769 = vmatpush1.bf16.msra.mxu0 %v747
      %770 = vmatprep.subr.bf16.mxu0 0
      %771 = vmatpush1.bf16.msra.mxu0 %v748
      %772 = vmatprep.subr.bf16.mxu0 0
      %773 = vmatpush1.bf16.msra.mxu0 %v749
      %774 = vmatprep.subr.bf16.mxu0 0
      %775 = vmatpush1.bf16.msra.mxu0 0
      %776 = vmatprep.subr.bf16.mxu0 0
      %777 = vmatpush1.bf16.msra.mxu0 0
      %778 = vmatprep.subr.bf16.mxu0 0
      %779 = vmatpush1.bf16.msra.mxu0 0
      %780 = vmatprep.subr.bf16.mxu0 0
      %781 = vmatpush1.bf16.msra.mxu0 0
      %782 = vmatprep.subr.bf16.mxu0 0
      %783 = vmatpush1.bf16.msra.mxu0 0
      %784 = vmatprep.subr.bf16.mxu0 0
      %785 = vmatpush1.bf16.msra.mxu0 0
      %786 = vmatprep.subr.bf16.mxu0 0
      %787 = vmatpush1.bf16.msra.mxu0 0
      %788 = vmatprep.subr.bf16.mxu0 0
      %789 = vmatpush1.bf16.msra.mxu0 0
      %790 = vmatprep.mubr.bf16.mxu0 0
      %791 = vmatmul.mubr.bf16.gmra.mrb[0].mxu0 %v690
      %v792 = vpop.f32.mrb[0].mxu0
      %v793 = vadd.f32 0.0, %v792
      %v794 = vpop.f32.mrb[0].mxu0
      %v795 = vpop.f32.mrb[0].mxu0
      %v796 = vadd.f32 0.0, %v795
      %v797 = vpop.f32.mrb[0].mxu0
      %798 = vmatprep.mubr.bf16.mxu0 0
      %799 = vmatmul.mubr.bf16.gmra.mrb[0].mxu0 %v698
      %v800 = vpop.f32.mrb[0].mxu0
      %v801 = vadd.f32 0.0, %v800
      %v802 = vpop.f32.mrb[0].mxu0
      %v803 = vpop.f32.mrb[0].mxu0
      %v804 = vadd.f32 0.0, %v803
      %v805 = vpop.f32.mrb[0].mxu0
      %806 = vmatprep.mubr.bf16.mxu0 0
      %807 = vmatmul.mubr.bf16.gmra.mrb[0].mxu0 %v706
      %v808 = vpop.f32.mrb[0].mxu0
      %v809 = vadd.f32 0.0, %v808
      %v810 = vpop.f32.mrb[0].mxu0
      %v811 = vpop.f32.mrb[0].mxu0
      %v812 = vadd.f32 0.0, %v811
      %v813 = vpop.f32.mrb[0].mxu0
      %814 = vdwg.mxu0
      %v831 = vunpack.c.l.b16 %v646
      %v832 = vunpack.c.l.b16 %v647
      %v833 = vunpack.c.l.b16 %v648
      %v834 = vunpack.c.l.b16 %v649
      %v835 = vunpack.c.l.b16 %v650
      %v836 = vunpack.c.l.b16 %v651
      %v837 = vunpack.c.l.b16 %v652
      %v838 = vunpack.c.l.b16 %v653
      %v839 = vunpack.c.l.b16 %v654
      %v840 = vunpack.c.l.b16 %v655
      %v841 = vunpack.c.l.b16 %v656
      %v842 = vunpack.c.l.b16 %v657
      %v843 = vunpack.c.l.b16 %v658
      %v844 = vunpack.c.l.b16 %v659
      %v845 = vunpack.c.l.b16 %v660
      %v846 = vunpack.c.l.b16 %v661
      %v847 = vpack.c.b16 %v832, %v831
      %v848 = vpack.c.b16 %v834, %v833
      %v849 = vpack.c.b16 %v836, %v835
      %v850 = vpack.c.b16 %v838, %v837
      %v851 = vpack.c.b16 %v840, %v839
      %v852 = vpack.c.b16 %v842, %v841
      %v853 = vpack.c.b16 %v844, %v843
      %v854 = vpack.c.b16 %v846, %v845
      %863 = vmatprep.subr.bf16.mxu0 0
      %864 = vmatpush1.bf16.msra.mxu0 %v847
      %865 = vmatprep.subr.bf16.mxu0 0
      %866 = vmatpush1.bf16.msra.mxu0 %v848
      %867 = vmatprep.subr.bf16.mxu0 0
      %868 = vmatpush1.bf16.msra.mxu0 %v849
      %869 = vmatprep.subr.bf16.mxu0 0
      %870 = vmatpush1.bf16.msra.mxu0 %v850
      %871 = vmatprep.subr.bf16.mxu0 0
      %872 = vmatpush1.bf16.msra.mxu0 %v851
      %873 = vmatprep.subr.bf16.mxu0 0
      %874 = vmatpush1.bf16.msra.mxu0 %v852
      %875 = vmatprep.subr.bf16.mxu0 0
      %876 = vmatpush1.bf16.msra.mxu0 %v853
      %877 = vmatprep.subr.bf16.mxu0 0
      %878 = vmatpush1.bf16.msra.mxu0 %v854
      %879 = vmatprep.subr.bf16.mxu0 0
      %880 = vmatpush1.bf16.msra.mxu0 0
      %881 = vmatprep.subr.bf16.mxu0 0
      %882 = vmatpush1.bf16.msra.mxu0 0
      %883 = vmatprep.subr.bf16.mxu0 0
      %884 = vmatpush1.bf16.msra.mxu0 0
      %885 = vmatprep.subr.bf16.mxu0 0
      %886 = vmatpush1.bf16.msra.mxu0 0
      %887 = vmatprep.subr.bf16.mxu0 0
      %888 = vmatpush1.bf16.msra.mxu0 0
      %889 = vmatprep.subr.bf16.mxu0 0
      %890 = vmatpush1.bf16.msra.mxu0 0
      %891 = vmatprep.subr.bf16.mxu0 0
      %892 = vmatpush1.bf16.msra.mxu0 0
      %893 = vmatprep.subr.bf16.mxu0 0
      %894 = vmatpush1.bf16.msra.mxu0 0
      %895 = vmatprep.mubr.bf16.mxu0 0
      %896 = vmatmul.mubr.bf16.gmra.mrb[0].mxu0 %v642
      %v897 = vpop.f32.mrb[0].mxu0
      %v898 = vadd.f32 %v793, %v897
      %v899 = vpop.f32.mrb[0].mxu0
      %v900 = vpop.f32.mrb[0].mxu0
      %v901 = vadd.f32 %v796, %v900
      %v902 = vpop.f32.mrb[0].mxu0
      %903 = vmatprep.mubr.bf16.mxu0 0
      %904 = vmatmul.mubr.bf16.gmra.mrb[0].mxu0 %v643
      %v905 = vpop.f32.mrb[0].mxu0
      %v906 = vadd.f32 %v801, %v905
      %v907 = vpop.f32.mrb[0].mxu0
      %v908 = vpop.f32.mrb[0].mxu0
      %v909 = vadd.f32 %v804, %v908
      %v910 = vpop.f32.mrb[0].mxu0
      %911 = vmatprep.mubr.bf16.mxu0 0
      %912 = vmatmul.mubr.bf16.gmra.mrb[0].mxu0 %v644
      %v913 = vpop.f32.mrb[0].mxu0
      %v914 = vadd.f32 %v809, %v913
      %v915 = vpop.f32.mrb[0].mxu0
      %v916 = vpop.f32.mrb[0].mxu0
      %v917 = vadd.f32 %v812, %v916
      %v918 = vpop.f32.mrb[0].mxu0
      %919 = vdwg.mxu0
      %s920 = scalar_lea.vmem %s2, 128
      %v921 = vld [vmem:[%s920] sm:$0xf]
      %v922 = vld [vmem:[%s920 + $0x4] sm:$0xf]
      %v923 = vld [vmem:[%s920 + $0x8] sm:$0xf]
      %v924 = vld [vmem:[%s920 + $0xc] sm:$0xf]
      %v925 = vld [vmem:[%s920 + $0x10] sm:$0xf]
      %v926 = vld [vmem:[%s920 + $0x14] sm:$0xf]
      %v927 = vld [vmem:[%s920 + $0x18] sm:$0xf]
      %v928 = vld [vmem:[%s920 + $0x1c] sm:$0xf]
      %v929 = vld [vmem:[%s920 + $0x20] sm:$0xf]
      %v930 = vld [vmem:[%s920 + $0x24] sm:$0xf]
      %v931 = vld [vmem:[%s920 + $0x28] sm:$0xf]
      %v932 = vld [vmem:[%s920 + $0x2c] sm:$0xf]
      %v933 = vld [vmem:[%s920 + $0x30] sm:$0xf]
      %v934 = vld [vmem:[%s920 + $0x34] sm:$0xf]
      %v935 = vld [vmem:[%s920 + $0x38] sm:$0xf]
      %v936 = vld [vmem:[%s920 + $0x3c] sm:$0xf]
      %v941 = vrot.slane %v642, 1
      %v942 = vrot.slane %v643, 1
      %v943 = vsel %vm410, %v941, %v942
      %v944 = vrot.slane %v644, 1
      %v945 = vsel %vm410, %v942, %v944
      %v946 = vrot.slane %v645, 1
      %v947 = vsel %vm410, %v944, %v946
      %v967 = vunpack.c.l.b16 %v921
      %v968 = vunpack.c.l.b16 %v922
      %v969 = vunpack.c.l.b16 %v923
      %v970 = vunpack.c.l.b16 %v924
      %v971 = vunpack.c.l.b16 %v925
      %v972 = vunpack.c.l.b16 %v926
      %v973 = vunpack.c.l.b16 %v927
      %v974 = vunpack.c.l.b16 %v928
      %v975 = vunpack.c.l.b16 %v929
      %v976 = vunpack.c.l.b16 %v930
      %v977 = vunpack.c.l.b16 %v931
      %v978 = vunpack.c.l.b16 %v932
      %v979 = vunpack.c.l.b16 %v933
      %v980 = vunpack.c.l.b16 %v934
      %v981 = vunpack.c.l.b16 %v935
      %v982 = vunpack.c.l.b16 %v936
      %v983 = vpack.c.b16 %v968, %v967
      %v984 = vpack.c.b16 %v970, %v969
      %v985 = vpack.c.b16 %v972, %v971
      %v986 = vpack.c.b16 %v974, %v973
      %v987 = vpack.c.b16 %v976, %v975
      %v988 = vpack.c.b16 %v978, %v977
      %v989 = vpack.c.b16 %v980, %v979
      %v990 = vpack.c.b16 %v982, %v981
      %999 = vmatprep.subr.bf16.mxu0 0
      %1000 = vmatpush1.bf16.msra.mxu0 %v983
      %1001 = vmatprep.subr.bf16.mxu0 0
      %1002 = vmatpush1.bf16.msra.mxu0 %v984
      %1003 = vmatprep.subr.bf16.mxu0 0
      %1004 = vmatpush1.bf16.msra.mxu0 %v985
      %1005 = vmatprep.subr.bf16.mxu0 0
      %1006 = vmatpush1.bf16.msra.mxu0 %v986
      %1007 = vmatprep.subr.bf16.mxu0 0
      %1008 = vmatpush1.bf16.msra.mxu0 %v987
      %1009 = vmatprep.subr.bf16.mxu0 0
      %1010 = vmatpush1.bf16.msra.mxu0 %v988
      %1011 = vmatprep.subr.bf16.mxu0 0
      %1012 = vmatpush1.bf16.msra.mxu0 %v989
      %1013 = vmatprep.subr.bf16.mxu0 0
      %1014 = vmatpush1.bf16.msra.mxu0 %v990
      %1015 = vmatprep.subr.bf16.mxu0 0
      %1016 = vmatpush1.bf16.msra.mxu0 0
      %1017 = vmatprep.subr.bf16.mxu0 0
      %1018 = vmatpush1.bf16.msra.mxu0 0
      %1019 = vmatprep.subr.bf16.mxu0 0
      %1020 = vmatpush1.bf16.msra.mxu0 0
      %1021 = vmatprep.subr.bf16.mxu0 0
      %1022 = vmatpush1.bf16.msra.mxu0 0
      %1023 = vmatprep.subr.bf16.mxu0 0
      %1024 = vmatpush1.bf16.msra.mxu0 0
      %1025 = vmatprep.subr.bf16.mxu0 0
      %1026 = vmatpush1.bf16.msra.mxu0 0
      %1027 = vmatprep.subr.bf16.mxu0 0
      %1028 = vmatpush1.bf16.msra.mxu0 0
      %1029 = vmatprep.subr.bf16.mxu0 0
      %1030 = vmatpush1.bf16.msra.mxu0 0
      %1031 = vmatprep.mubr.bf16.mxu0 0
      %1032 = vmatmul.mubr.bf16.gmra.mrb[0].mxu0 %v943
      %v1033 = vpop.f32.mrb[0].mxu0
      %v1034 = vadd.f32 0.0, %v1033
      %v1035 = vpop.f32.mrb[0].mxu0
      %v1036 = vpop.f32.mrb[0].mxu0
      %v1037 = vadd.f32 0.0, %v1036
      %v1038 = vpop.f32.mrb[0].mxu0
      %1039 = vmatprep.mubr.bf16.mxu0 0
      %1040 = vmatmul.mubr.bf16.gmra.mrb[0].mxu0 %v945
      %v1041 = vpop.f32.mrb[0].mxu0
      %v1042 = vadd.f32 0.0, %v1041
      %v1043 = vpop.f32.mrb[0].mxu0
      %v1044 = vpop.f32.mrb[0].mxu0
      %v1045 = vadd.f32 0.0, %v1044
      %v1046 = vpop.f32.mrb[0].mxu0
      %1047 = vmatprep.mubr.bf16.mxu0 0
      %1048 = vmatmul.mubr.bf16.gmra.mrb[0].mxu0 %v947
      %v1049 = vpop.f32.mrb[0].mxu0
      %v1050 = vadd.f32 0.0, %v1049
      %v1051 = vpop.f32.mrb[0].mxu0
      %v1052 = vpop.f32.mrb[0].mxu0
      %v1053 = vadd.f32 0.0, %v1052
      %v1054 = vpop.f32.mrb[0].mxu0
      %1055 = vdwg.mxu0
      %v1056 = vadd.f32 %v898, %v1034
      %v1057 = vadd.f32 %v901, %v1037
      %v1058 = vadd.f32 %v906, %v1042
      %v1059 = vadd.f32 %v909, %v1045
      %v1060 = vadd.f32 %v914, %v1050
      %v1061 = vadd.f32 %v917, %v1053
      %s1062 = scalar_lea.vmem %s3, 1
      %v1063 = vld [vmem:[%s1062] sm:$0x1]
      %v1065 = vlaneseq
      %v1066 = vshrl.u32 %v1065, 7
      %v1067 = vsub.s32 0, %v1066
      %v1068 = vrot.slane %v1063, %v1067
      %v1070 = vadd.f32 %v1056, %v1068
      %v1071 = vadd.f32 %v1057, %v1068
      %v1072 = vadd.f32 %v1058, %v1068
      %v1073 = vadd.f32 %v1059, %v1068
      %v1074 = vadd.f32 %v1060, %v1068
      %v1075 = vadd.f32 %v1061, %v1068
      %vm1076 = vcmp.ge.s32.totalorder %v222, 1
      %vm1077 = vcmp.ge.s32.totalorder %v223, 1
      %vm1078 = vcmp.ge.s32.totalorder %v224, 1
      %vm1079 = vcmp.le.s32.totalorder %v222, 14
      %vm1080 = vcmp.le.s32.totalorder %v223, 14
      %vm1081 = vcmp.le.s32.totalorder %v224, 14
      %vm1082 = vmand %vm1076, %vm1079
      %vm1083 = vmand %vm1077, %vm1080
      %vm1084 = vmand %vm1078, %vm1081
      %v1085 = vsel %vm1082, %v1070, 0.0
      %v1086 = vsel %vm1083, %v1071, 0.0
      %v1087 = vsel %vm1084, %v1072, 0.0
      %v1088 = vsel %vm1082, %v1073, 0.0
      %v1089 = vsel %vm1083, %v1074, 0.0
      %v1090 = vsel %vm1084, %v1075, 0.0
      %v1097 = vrot.slane 0.0, 1
      %v1098 = vrot.slane %v1085, 1
      %v1099 = vsel %vm527, %v1097, %v1098
      %v1100 = vrot.slane %v1086, 1
      %v1101 = vsel %vm527, %v1098, %v1100
      %v1102 = vrot.slane %v1087, 1
      %v1103 = vsel %vm527, %v1100, %v1102
      %v1104 = vrot.slane %v1088, 1
      %v1105 = vsel %vm527, %v1102, %v1104
      %v1106 = vrot.slane %v1089, 1
      %v1107 = vsel %vm527, %v1104, %v1106
      %v1108 = vrot.slane %v1090, 1
      %v1109 = vsel %vm527, %v1106, %v1108
      %v1117 = vmax.f32 %v1099, 0.0
      %v1118 = vmax.f32 %v1085, %v1101
      %v1119 = vmax.f32 %v1086, %v1103
      %v1120 = vmax.f32 %v1087, %v1105
      %v1121 = vmax.f32 %v1088, %v1107
      %v1122 = vmax.f32 %v1089, %v1109
      %v1123 = vmax.f32 %v1090, %v1108
      %v1124 = vrot.slane %v1085, 2
      %v1125 = vrot.slane %v1086, 2
      %v1126 = vsel %vm554, %v1124, %v1125
      %v1127 = vrot.slane %v1087, 2
      %v1128 = vsel %vm554, %v1125, %v1127
      %v1129 = vrot.slane %v1088, 2
      %v1130 = vsel %vm554, %v1127, %v1129
      %v1131 = vrot.slane %v1089, 2
      %v1132 = vsel %vm554, %v1129, %v1131
      %v1133 = vrot.slane %v1090, 2
      %v1134 = vsel %vm554, %v1131, %v1133
      %v1142 = vmax.f32 %v1117, %v1124
      %v1143 = vmax.f32 %v1118, %v1126
      %v1144 = vmax.f32 %v1119, %v1128
      %v1145 = vmax.f32 %v1120, %v1130
      %v1146 = vmax.f32 %v1121, %v1132
      %v1147 = vmax.f32 %v1122, %v1134
      %v1148 = vmax.f32 %v1123, %v1133
      %v1149 = vmax.f32 %v1142, 0.0
      %v1150 = vmax.f32 %v1143, 0.0
      %v1151 = vmax.f32 %v1144, 0.0
      %v1152 = vmax.f32 %v1145, 0.0
      %v1153 = vmax.f32 %v1146, 0.0
      %v1154 = vmax.f32 %v1147, 0.0
      %v1155 = vmax.f32 %v1148, 0.0
      %v1163 = vrot.slane %v1149, 6
      %v1164 = vrot.slane %v1150, 6
      %v1165 = vsel %vm277, %v1163, %v1164
      %v1166 = vrot.slane %v1151, 6
      %v1167 = vsel %vm277, %v1164, %v1166
      %v1168 = vrot.slane %v1152, 6
      %v1169 = vsel %vm277, %v1166, %v1168
      %v1170 = vrot.slane %v1153, 6
      %v1171 = vsel %vm277, %v1168, %v1170
      %v1172 = vrot.slane %v1154, 6
      %v1173 = vsel %vm277, %v1170, %v1172
      %v1174 = vrot.slane %v1155, 6
      %v1175 = vsel %vm277, %v1172, %v1174
      %v1182 = vsel %vm592, %v1165, 0.0
      %v1183 = vsel %vm593, %v1167, 0.0
      %v1184 = vsel %vm594, %v1169, 0.0
      %v1185 = vsel %vm592, %v1171, 0.0
      %v1186 = vsel %vm593, %v1173, 0.0
      %v1187 = vsel %vm594, %v1175, 0.0
      %1188 = vst [vmem:[#allocation4] sm:$0xff] %v1182
      %1189 = vst [vmem:[#allocation4 + $0x8] sm:$0xff] %v1183
      %1190 = vst [vmem:[#allocation4 + $0x10] sm:$0xff] %v1184
      %1191 = vst [vmem:[#allocation4 + $0x18] sm:$0xff] %v1185
      %1192 = vst [vmem:[#allocation4 + $0x20] sm:$0xff] %v1186
      %1193 = vst [vmem:[#allocation4 + $0x28] sm:$0xff] %v1187
      %1194 = vst [vmem:[#allocation4 + $0x30] sm:$0xff] 0.0
      %v1195 = vld [vmem:[#allocation4] sm:$0xff]
      %v1196 = vld [vmem:[#allocation4 + $0x8] sm:$0xff]
      %v1197 = vld [vmem:[#allocation4 + $0x10] sm:$0xff]
      %v1198 = vld [vmem:[#allocation4 + $0x18] sm:$0xff]
      %v1199 = vld [vmem:[#allocation4 + $0x20] sm:$0xff]
      %v1200 = vld [vmem:[#allocation4 + $0x28] sm:$0xff]
      %v1201 = vld [vmem:[#allocation4 + $0x30] sm:$0xff]
      %v1202 = vpack.c.bf16 %v1196, %v1195
      %v1203 = vpack.c.bf16 %v1198, %v1197
      %v1204 = vpack.c.bf16 %v1200, %v1199
      %v1205 = vpack.c.bf16 %v1201, %v1201
      %s1206 = scalar_lea.vmem %s2, 192
      %v1207 = vld [vmem:[%s1206] sm:$0xf]
      %v1208 = vld [vmem:[%s1206 + $0x4] sm:$0xf]
      %v1209 = vld [vmem:[%s1206 + $0x8] sm:$0xf]
      %v1210 = vld [vmem:[%s1206 + $0xc] sm:$0xf]
      %v1211 = vld [vmem:[%s1206 + $0x10] sm:$0xf]
      %v1212 = vld [vmem:[%s1206 + $0x14] sm:$0xf]
      %v1213 = vld [vmem:[%s1206 + $0x18] sm:$0xf]
      %v1214 = vld [vmem:[%s1206 + $0x1c] sm:$0xf]
      %v1215 = vld [vmem:[%s1206 + $0x20] sm:$0xf]
      %v1216 = vld [vmem:[%s1206 + $0x24] sm:$0xf]
      %v1217 = vld [vmem:[%s1206 + $0x28] sm:$0xf]
      %v1218 = vld [vmem:[%s1206 + $0x2c] sm:$0xf]
      %v1219 = vld [vmem:[%s1206 + $0x30] sm:$0xf]
      %v1220 = vld [vmem:[%s1206 + $0x34] sm:$0xf]
      %v1221 = vld [vmem:[%s1206 + $0x38] sm:$0xf]
      %v1222 = vld [vmem:[%s1206 + $0x3c] sm:$0xf]
      %s1223 = scalar_lea.vmem %s2, 256
      %v1224 = vld [vmem:[%s1223] sm:$0xf]
      %v1225 = vld [vmem:[%s1223 + $0x4] sm:$0xf]
      %v1226 = vld [vmem:[%s1223 + $0x8] sm:$0xf]
      %v1227 = vld [vmem:[%s1223 + $0xc] sm:$0xf]
      %v1228 = vld [vmem:[%s1223 + $0x10] sm:$0xf]
      %v1229 = vld [vmem:[%s1223 + $0x14] sm:$0xf]
      %v1230 = vld [vmem:[%s1223 + $0x18] sm:$0xf]
      %v1231 = vld [vmem:[%s1223 + $0x1c] sm:$0xf]
      %v1232 = vld [vmem:[%s1223 + $0x20] sm:$0xf]
      %v1233 = vld [vmem:[%s1223 + $0x24] sm:$0xf]
      %v1234 = vld [vmem:[%s1223 + $0x28] sm:$0xf]
      %v1235 = vld [vmem:[%s1223 + $0x2c] sm:$0xf]
      %v1236 = vld [vmem:[%s1223 + $0x30] sm:$0xf]
      %v1237 = vld [vmem:[%s1223 + $0x34] sm:$0xf]
      %v1238 = vld [vmem:[%s1223 + $0x38] sm:$0xf]
      %v1239 = vld [vmem:[%s1223 + $0x3c] sm:$0xf]
      %v1241 = vshrl.u32 %v1202, 16
      %v1243 = vshll.u32 %v1202, 16
      %v1245 = vrot.slane %v1243, 1
      %v1246 = vor.u32 %v1241, %v1245
      %v1248 = vshll.u32 %v1203, 16
      %v1250 = vrot.slane %v1248, 1
      %v1251 = vsel %vm239, %v1246, %v1250
      %v1252 = vshrl.u32 %v1203, 16
      %v1254 = vor.u32 %v1252, %v1250
      %v1256 = vshll.u32 %v1204, 16
      %v1258 = vrot.slane %v1256, 1
      %v1259 = vsel %vm239, %v1254, %v1258
      %v1260 = vshrl.u32 %v1204, 16
      %v1262 = vor.u32 %v1260, %v1258
      %v1264 = vshll.u32 %v1205, 16
      %v1266 = vrot.slane %v1264, 1
      %v1267 = vsel %vm239, %v1262, %v1266
      %v1287 = vunpack.c.l.b16 %v1224
      %v1288 = vunpack.c.l.b16 %v1225
      %v1289 = vunpack.c.l.b16 %v1226
      %v1290 = vunpack.c.l.b16 %v1227
      %v1291 = vunpack.c.l.b16 %v1228
      %v1292 = vunpack.c.l.b16 %v1229
      %v1293 = vunpack.c.l.b16 %v1230
      %v1294 = vunpack.c.l.b16 %v1231
      %v1295 = vunpack.c.l.b16 %v1232
      %v1296 = vunpack.c.l.b16 %v1233
      %v1297 = vunpack.c.l.b16 %v1234
      %v1298 = vunpack.c.l.b16 %v1235
      %v1299 = vunpack.c.l.b16 %v1236
      %v1300 = vunpack.c.l.b16 %v1237
      %v1301 = vunpack.c.l.b16 %v1238
      %v1302 = vunpack.c.l.b16 %v1239
      %v1303 = vpack.c.b16 %v1288, %v1287
      %v1304 = vpack.c.b16 %v1290, %v1289
      %v1305 = vpack.c.b16 %v1292, %v1291
      %v1306 = vpack.c.b16 %v1294, %v1293
      %v1307 = vpack.c.b16 %v1296, %v1295
      %v1308 = vpack.c.b16 %v1298, %v1297
      %v1309 = vpack.c.b16 %v1300, %v1299
      %v1310 = vpack.c.b16 %v1302, %v1301
      %1319 = vmatprep.subr.bf16.mxu0 0
      %1320 = vmatpush1.bf16.msra.mxu0 %v1303
      %1321 = vmatprep.subr.bf16.mxu0 0
      %1322 = vmatpush1.bf16.msra.mxu0 %v1304
      %1323 = vmatprep.subr.bf16.mxu0 0
      %1324 = vmatpush1.bf16.msra.mxu0 %v1305
      %1325 = vmatprep.subr.bf16.mxu0 0
      %1326 = vmatpush1.bf16.msra.mxu0 %v1306
      %1327 = vmatprep.subr.bf16.mxu0 0
      %1328 = vmatpush1.bf16.msra.mxu0 %v1307
      %1329 = vmatprep.subr.bf16.mxu0 0
      %1330 = vmatpush1.bf16.msra.mxu0 %v1308
      %1331 = vmatprep.subr.bf16.mxu0 0
      %1332 = vmatpush1.bf16.msra.mxu0 %v1309
      %1333 = vmatprep.subr.bf16.mxu0 0
      %1334 = vmatpush1.bf16.msra.mxu0 %v1310
      %1335 = vmatprep.subr.bf16.mxu0 0
      %1336 = vmatpush1.bf16.msra.mxu0 0
      %1337 = vmatprep.subr.bf16.mxu0 0
      %1338 = vmatpush1.bf16.msra.mxu0 0
      %1339 = vmatprep.subr.bf16.mxu0 0
      %1340 = vmatpush1.bf16.msra.mxu0 0
      %1341 = vmatprep.subr.bf16.mxu0 0
      %1342 = vmatpush1.bf16.msra.mxu0 0
      %1343 = vmatprep.subr.bf16.mxu0 0
      %1344 = vmatpush1.bf16.msra.mxu0 0
      %1345 = vmatprep.subr.bf16.mxu0 0
      %1346 = vmatpush1.bf16.msra.mxu0 0
      %1347 = vmatprep.subr.bf16.mxu0 0
      %1348 = vmatpush1.bf16.msra.mxu0 0
      %1349 = vmatprep.subr.bf16.mxu0 0
      %1350 = vmatpush1.bf16.msra.mxu0 0
      %1351 = vmatprep.mubr.bf16.mxu0 0
      %1352 = vmatmul.mubr.bf16.gmra.mrb[0].mxu0 %v1251
      %v1353 = vpop.f32.mrb[0].mxu0
      %v1354 = vadd.f32 0.0, %v1353
      %v1355 = vpop.f32.mrb[0].mxu0
      %v1356 = vpop.f32.mrb[0].mxu0
      %v1357 = vadd.f32 0.0, %v1356
      %v1358 = vpop.f32.mrb[0].mxu0
      %1359 = vmatprep.mubr.bf16.mxu0 0
      %1360 = vmatmul.mubr.bf16.gmra.mrb[0].mxu0 %v1259
      %v1361 = vpop.f32.mrb[0].mxu0
      %v1362 = vadd.f32 0.0, %v1361
      %v1363 = vpop.f32.mrb[0].mxu0
      %v1364 = vpop.f32.mrb[0].mxu0
      %v1365 = vadd.f32 0.0, %v1364
      %v1366 = vpop.f32.mrb[0].mxu0
      %1367 = vmatprep.mubr.bf16.mxu0 0
      %1368 = vmatmul.mubr.bf16.gmra.mrb[0].mxu0 %v1267
      %v1369 = vpop.f32.mrb[0].mxu0
      %v1370 = vadd.f32 0.0, %v1369
      %v1371 = vpop.f32.mrb[0].mxu0
      %v1372 = vpop.f32.mrb[0].mxu0
      %v1373 = vadd.f32 0.0, %v1372
      %v1374 = vpop.f32.mrb[0].mxu0
      %1375 = vdwg.mxu0
      %v1392 = vunpack.c.l.b16 %v1207
      %v1393 = vunpack.c.l.b16 %v1208
      %v1394 = vunpack.c.l.b16 %v1209
      %v1395 = vunpack.c.l.b16 %v1210
      %v1396 = vunpack.c.l.b16 %v1211
      %v1397 = vunpack.c.l.b16 %v1212
      %v1398 = vunpack.c.l.b16 %v1213
      %v1399 = vunpack.c.l.b16 %v1214
      %v1400 = vunpack.c.l.b16 %v1215
      %v1401 = vunpack.c.l.b16 %v1216
      %v1402 = vunpack.c.l.b16 %v1217
      %v1403 = vunpack.c.l.b16 %v1218
      %v1404 = vunpack.c.l.b16 %v1219
      %v1405 = vunpack.c.l.b16 %v1220
      %v1406 = vunpack.c.l.b16 %v1221
      %v1407 = vunpack.c.l.b16 %v1222
      %v1408 = vpack.c.b16 %v1393, %v1392
      %v1409 = vpack.c.b16 %v1395, %v1394
      %v1410 = vpack.c.b16 %v1397, %v1396
      %v1411 = vpack.c.b16 %v1399, %v1398
      %v1412 = vpack.c.b16 %v1401, %v1400
      %v1413 = vpack.c.b16 %v1403, %v1402
      %v1414 = vpack.c.b16 %v1405, %v1404
      %v1415 = vpack.c.b16 %v1407, %v1406
      %1424 = vmatprep.subr.bf16.mxu0 0
      %1425 = vmatpush1.bf16.msra.mxu0 %v1408
      %1426 = vmatprep.subr.bf16.mxu0 0
      %1427 = vmatpush1.bf16.msra.mxu0 %v1409
      %1428 = vmatprep.subr.bf16.mxu0 0
      %1429 = vmatpush1.bf16.msra.mxu0 %v1410
      %1430 = vmatprep.subr.bf16.mxu0 0
      %1431 = vmatpush1.bf16.msra.mxu0 %v1411
      %1432 = vmatprep.subr.bf16.mxu0 0
      %1433 = vmatpush1.bf16.msra.mxu0 %v1412
      %1434 = vmatprep.subr.bf16.mxu0 0
      %1435 = vmatpush1.bf16.msra.mxu0 %v1413
      %1436 = vmatprep.subr.bf16.mxu0 0
      %1437 = vmatpush1.bf16.msra.mxu0 %v1414
      %1438 = vmatprep.subr.bf16.mxu0 0
      %1439 = vmatpush1.bf16.msra.mxu0 %v1415
      %1440 = vmatprep.subr.bf16.mxu0 0
      %1441 = vmatpush1.bf16.msra.mxu0 0
      %1442 = vmatprep.subr.bf16.mxu0 0
      %1443 = vmatpush1.bf16.msra.mxu0 0
      %1444 = vmatprep.subr.bf16.mxu0 0
      %1445 = vmatpush1.bf16.msra.mxu0 0
      %1446 = vmatprep.subr.bf16.mxu0 0
      %1447 = vmatpush1.bf16.msra.mxu0 0
      %1448 = vmatprep.subr.bf16.mxu0 0
      %1449 = vmatpush1.bf16.msra.mxu0 0
      %1450 = vmatprep.subr.bf16.mxu0 0
      %1451 = vmatpush1.bf16.msra.mxu0 0
      %1452 = vmatprep.subr.bf16.mxu0 0
      %1453 = vmatpush1.bf16.msra.mxu0 0
      %1454 = vmatprep.subr.bf16.mxu0 0
      %1455 = vmatpush1.bf16.msra.mxu0 0
      %1456 = vmatprep.mubr.bf16.mxu0 0
      %1457 = vmatmul.mubr.bf16.gmra.mrb[0].mxu0 %v1202
      %v1458 = vpop.f32.mrb[0].mxu0
      %v1459 = vadd.f32 %v1354, %v1458
      %v1460 = vpop.f32.mrb[0].mxu0
      %v1461 = vpop.f32.mrb[0].mxu0
      %v1462 = vadd.f32 %v1357, %v1461
      %v1463 = vpop.f32.mrb[0].mxu0
      %1464 = vmatprep.mubr.bf16.mxu0 0
      %1465 = vmatmul.mubr.bf16.gmra.mrb[0].mxu0 %v1203
      %v1466 = vpop.f32.mrb[0].mxu0
      %v1467 = vadd.f32 %v1362, %v1466
      %v1468 = vpop.f32.mrb[0].mxu0
      %v1469 = vpop.f32.mrb[0].mxu0
      %v1470 = vadd.f32 %v1365, %v1469
      %v1471 = vpop.f32.mrb[0].mxu0
      %1472 = vmatprep.mubr.bf16.mxu0 0
      %1473 = vmatmul.mubr.bf16.gmra.mrb[0].mxu0 %v1204
      %v1474 = vpop.f32.mrb[0].mxu0
      %v1475 = vadd.f32 %v1370, %v1474
      %v1476 = vpop.f32.mrb[0].mxu0
      %v1477 = vpop.f32.mrb[0].mxu0
      %v1478 = vadd.f32 %v1373, %v1477
      %v1479 = vpop.f32.mrb[0].mxu0
      %1480 = vdwg.mxu0
      %s1481 = scalar_lea.vmem %s2, 320
      %v1482 = vld [vmem:[%s1481] sm:$0xf]
      %v1483 = vld [vmem:[%s1481 + $0x4] sm:$0xf]
      %v1484 = vld [vmem:[%s1481 + $0x8] sm:$0xf]
      %v1485 = vld [vmem:[%s1481 + $0xc] sm:$0xf]
      %v1486 = vld [vmem:[%s1481 + $0x10] sm:$0xf]
      %v1487 = vld [vmem:[%s1481 + $0x14] sm:$0xf]
      %v1488 = vld [vmem:[%s1481 + $0x18] sm:$0xf]
      %v1489 = vld [vmem:[%s1481 + $0x1c] sm:$0xf]
      %v1490 = vld [vmem:[%s1481 + $0x20] sm:$0xf]
      %v1491 = vld [vmem:[%s1481 + $0x24] sm:$0xf]
      %v1492 = vld [vmem:[%s1481 + $0x28] sm:$0xf]
      %v1493 = vld [vmem:[%s1481 + $0x2c] sm:$0xf]
      %v1494 = vld [vmem:[%s1481 + $0x30] sm:$0xf]
      %v1495 = vld [vmem:[%s1481 + $0x34] sm:$0xf]
      %v1496 = vld [vmem:[%s1481 + $0x38] sm:$0xf]
      %v1497 = vld [vmem:[%s1481 + $0x3c] sm:$0xf]
      %v1502 = vrot.slane %v1202, 1
      %v1503 = vrot.slane %v1203, 1
      %v1504 = vsel %vm410, %v1502, %v1503
      %v1505 = vrot.slane %v1204, 1
      %v1506 = vsel %vm410, %v1503, %v1505
      %v1507 = vrot.slane %v1205, 1
      %v1508 = vsel %vm410, %v1505, %v1507
      %v1528 = vunpack.c.l.b16 %v1482
      %v1529 = vunpack.c.l.b16 %v1483
      %v1530 = vunpack.c.l.b16 %v1484
      %v1531 = vunpack.c.l.b16 %v1485
      %v1532 = vunpack.c.l.b16 %v1486
      %v1533 = vunpack.c.l.b16 %v1487
      %v1534 = vunpack.c.l.b16 %v1488
      %v1535 = vunpack.c.l.b16 %v1489
      %v1536 = vunpack.c.l.b16 %v1490
      %v1537 = vunpack.c.l.b16 %v1491
      %v1538 = vunpack.c.l.b16 %v1492
      %v1539 = vunpack.c.l.b16 %v1493
      %v1540 = vunpack.c.l.b16 %v1494
      %v1541 = vunpack.c.l.b16 %v1495
      %v1542 = vunpack.c.l.b16 %v1496
      %v1543 = vunpack.c.l.b16 %v1497
      %v1544 = vpack.c.b16 %v1529, %v1528
      %v1545 = vpack.c.b16 %v1531, %v1530
      %v1546 = vpack.c.b16 %v1533, %v1532
      %v1547 = vpack.c.b16 %v1535, %v1534
      %v1548 = vpack.c.b16 %v1537, %v1536
      %v1549 = vpack.c.b16 %v1539, %v1538
      %v1550 = vpack.c.b16 %v1541, %v1540
      %v1551 = vpack.c.b16 %v1543, %v1542
      %1560 = vmatprep.subr.bf16.mxu0 0
      %1561 = vmatpush1.bf16.msra.mxu0 %v1544
      %1562 = vmatprep.subr.bf16.mxu0 0
      %1563 = vmatpush1.bf16.msra.mxu0 %v1545
      %1564 = vmatprep.subr.bf16.mxu0 0
      %1565 = vmatpush1.bf16.msra.mxu0 %v1546
      %1566 = vmatprep.subr.bf16.mxu0 0
      %1567 = vmatpush1.bf16.msra.mxu0 %v1547
      %1568 = vmatprep.subr.bf16.mxu0 0
      %1569 = vmatpush1.bf16.msra.mxu0 %v1548
      %1570 = vmatprep.subr.bf16.mxu0 0
      %1571 = vmatpush1.bf16.msra.mxu0 %v1549
      %1572 = vmatprep.subr.bf16.mxu0 0
      %1573 = vmatpush1.bf16.msra.mxu0 %v1550
      %1574 = vmatprep.subr.bf16.mxu0 0
      %1575 = vmatpush1.bf16.msra.mxu0 %v1551
      %1576 = vmatprep.subr.bf16.mxu0 0
      %1577 = vmatpush1.bf16.msra.mxu0 0
      %1578 = vmatprep.subr.bf16.mxu0 0
      %1579 = vmatpush1.bf16.msra.mxu0 0
      %1580 = vmatprep.subr.bf16.mxu0 0
      %1581 = vmatpush1.bf16.msra.mxu0 0
      %1582 = vmatprep.subr.bf16.mxu0 0
      %1583 = vmatpush1.bf16.msra.mxu0 0
      %1584 = vmatprep.subr.bf16.mxu0 0
      %1585 = vmatpush1.bf16.msra.mxu0 0
      %1586 = vmatprep.subr.bf16.mxu0 0
      %1587 = vmatpush1.bf16.msra.mxu0 0
      %1588 = vmatprep.subr.bf16.mxu0 0
      %1589 = vmatpush1.bf16.msra.mxu0 0
      %1590 = vmatprep.subr.bf16.mxu0 0
      %1591 = vmatpush1.bf16.msra.mxu0 0
      %1592 = vmatprep.mubr.bf16.mxu0 0
      %1593 = vmatmul.mubr.bf16.gmra.mrb[0].mxu0 %v1504
      %v1594 = vpop.f32.mrb[0].mxu0
      %v1595 = vadd.f32 0.0, %v1594
      %v1596 = vpop.f32.mrb[0].mxu0
      %v1597 = vpop.f32.mrb[0].mxu0
      %v1598 = vadd.f32 0.0, %v1597
      %v1599 = vpop.f32.mrb[0].mxu0
      %1600 = vmatprep.mubr.bf16.mxu0 0
      %1601 = vmatmul.mubr.bf16.gmra.mrb[0].mxu0 %v1506
      %v1602 = vpop.f32.mrb[0].mxu0
      %v1603 = vadd.f32 0.0, %v1602
      %v1604 = vpop.f32.mrb[0].mxu0
      %v1605 = vpop.f32.mrb[0].mxu0
      %v1606 = vadd.f32 0.0, %v1605
      %v1607 = vpop.f32.mrb[0].mxu0
      %1608 = vmatprep.mubr.bf16.mxu0 0
      %1609 = vmatmul.mubr.bf16.gmra.mrb[0].mxu0 %v1508
      %v1610 = vpop.f32.mrb[0].mxu0
      %v1611 = vadd.f32 0.0, %v1610
      %v1612 = vpop.f32.mrb[0].mxu0
      %v1613 = vpop.f32.mrb[0].mxu0
      %v1614 = vadd.f32 0.0, %v1613
      %v1615 = vpop.f32.mrb[0].mxu0
      %1616 = vdwg.mxu0
      %v1617 = vadd.f32 %v1459, %v1595
      %v1618 = vadd.f32 %v1462, %v1598
      %v1619 = vadd.f32 %v1467, %v1603
      %v1620 = vadd.f32 %v1470, %v1606
      %v1621 = vadd.f32 %v1475, %v1611
      %v1622 = vadd.f32 %v1478, %v1614
      %s1623 = scalar_lea.vmem %s3, 2
      %v1624 = vld [vmem:[%s1623] sm:$0x1]
      %v1626 = vlaneseq
      %v1627 = vshrl.u32 %v1626, 7
      %v1628 = vsub.s32 0, %v1627
      %v1629 = vrot.slane %v1624, %v1628
      %v1631 = vadd.f32 %v1617, %v1629
      %v1632 = vadd.f32 %v1618, %v1629
      %v1633 = vadd.f32 %v1619, %v1629
      %v1634 = vadd.f32 %v1620, %v1629
      %v1635 = vadd.f32 %v1621, %v1629
      %v1636 = vadd.f32 %v1622, %v1629
      %v1637 = vsel %vm1082, %v1631, 0.0
      %v1638 = vsel %vm1083, %v1632, 0.0
      %v1639 = vsel %vm1084, %v1633, 0.0
      %v1640 = vsel %vm1082, %v1634, 0.0
      %v1641 = vsel %vm1083, %v1635, 0.0
      %v1642 = vsel %vm1084, %v1636, 0.0
      %v1649 = vrot.slane %v1637, 1
      %v1650 = vsel %vm527, %v1097, %v1649
      %v1651 = vrot.slane %v1638, 1
      %v1652 = vsel %vm527, %v1649, %v1651
      %v1653 = vrot.slane %v1639, 1
      %v1654 = vsel %vm527, %v1651, %v1653
      %v1655 = vrot.slane %v1640, 1
      %v1656 = vsel %vm527, %v1653, %v1655
      %v1657 = vrot.slane %v1641, 1
      %v1658 = vsel %vm527, %v1655, %v1657
      %v1659 = vrot.slane %v1642, 1
      %v1660 = vsel %vm527, %v1657, %v1659
      %v1668 = vmax.f32 %v1650, 0.0
      %v1669 = vmax.f32 %v1637, %v1652
      %v1670 = vmax.f32 %v1638, %v1654
      %v1671 = vmax.f32 %v1639, %v1656
      %v1672 = vmax.f32 %v1640, %v1658
      %v1673 = vmax.f32 %v1641, %v1660
      %v1674 = vmax.f32 %v1642, %v1659
      %v1675 = vrot.slane %v1637, 2
      %v1676 = vrot.slane %v1638, 2
      %v1677 = vsel %vm554, %v1675, %v1676
      %v1678 = vrot.slane %v1639, 2
      %v1679 = vsel %vm554, %v1676, %v1678
      %v1680 = vrot.slane %v1640, 2
      %v1681 = vsel %vm554, %v1678, %v1680
      %v1682 = vrot.slane %v1641, 2
      %v1683 = vsel %vm554, %v1680, %v1682
      %v1684 = vrot.slane %v1642, 2
      %v1685 = vsel %vm554, %v1682, %v1684
      %v1693 = vmax.f32 %v1668, %v1675
      %v1694 = vmax.f32 %v1669, %v1677
      %v1695 = vmax.f32 %v1670, %v1679
      %v1696 = vmax.f32 %v1671, %v1681
      %v1697 = vmax.f32 %v1672, %v1683
      %v1698 = vmax.f32 %v1673, %v1685
      %v1699 = vmax.f32 %v1674, %v1684
      %v1700 = vmax.f32 %v1693, 0.0
      %v1701 = vmax.f32 %v1694, 0.0
      %v1702 = vmax.f32 %v1695, 0.0
      %v1703 = vmax.f32 %v1696, 0.0
      %v1704 = vmax.f32 %v1697, 0.0
      %v1705 = vmax.f32 %v1698, 0.0
      %v1706 = vmax.f32 %v1699, 0.0
      %v1714 = vrot.slane %v1700, 6
      %v1715 = vrot.slane %v1701, 6
      %v1716 = vsel %vm277, %v1714, %v1715
      %v1717 = vrot.slane %v1702, 6
      %v1718 = vsel %vm277, %v1715, %v1717
      %v1719 = vrot.slane %v1703, 6
      %v1720 = vsel %vm277, %v1717, %v1719
      %v1721 = vrot.slane %v1704, 6
      %v1722 = vsel %vm277, %v1719, %v1721
      %v1723 = vrot.slane %v1705, 6
      %v1724 = vsel %vm277, %v1721, %v1723
      %v1725 = vrot.slane %v1706, 6
      %v1726 = vsel %vm277, %v1723, %v1725
      %v1733 = vsel %vm592, %v1716, 0.0
      %v1734 = vsel %vm593, %v1718, 0.0
      %v1735 = vsel %vm594, %v1720, 0.0
      %v1736 = vsel %vm592, %v1722, 0.0
      %v1737 = vsel %vm593, %v1724, 0.0
      %v1738 = vsel %vm594, %v1726, 0.0
      %1739 = vst [vmem:[%s202] sm:$0xff] %v1733
      %1740 = vst [vmem:[%s202 + $0x8] sm:$0xff] %v1734
      %1741 = vst [vmem:[%s202 + $0x10] sm:$0xff] %v1735
      %1742 = vst [vmem:[%s202 + $0x18] sm:$0xff] %v1736
      %1743 = vst [vmem:[%s202 + $0x20] sm:$0xff] %v1737
      %1744 = vst [vmem:[%s202 + $0x28] sm:$0xff] %v1738
      %p1745 = scmp.lt.s32.totalorder %s15, 1
      %s1746 = scalar_select %p1745, %s15, 1
      %s1747 = smul.addr %s1746, 6
      %s1748 = smul.addr %s1747, 8
      %s1749 = scalar_lea.vmem %s4, %s1748
      // Predicated region
      $region37: #{_forward_impl.1} parent=35 // pred_check
        %p1750 = pneg %p122
      $region38: #{_forward_impl.1} parent=35 // pred_check_branch
        %1752 = sbr.rel (%p1750) target = $region40
      $region39: #{_forward_impl.1} parent=35 // pred_region
        _
      $region40: #{_forward_impl.1} parent=35 // pred_fallthru
        _
    $region36: #{_forward_impl.1} parent=5 // pred_fallthru
      _
    %p1753 = scmp.le.s32.totalorder 2, %s10
    // Predicated region
    $region41: #{_forward_impl.1} parent=5 // pred_check
      %p1754 = pneg %p1753
    $region42: #{_forward_impl.1} parent=5 // pred_check_branch
      %1756 = sbr.rel (%p1754) target = $region44
    $region43: #{_forward_impl.1} parent=5 // pred_region
      %s1757 = ssub.s32 %s10, 2
      // Predicated region
      $region45: #{_forward_impl.1} parent=43 // pred_check
        %p1758 = pneg %p128
      $region46: #{_forward_impl.1} parent=43 // pred_check_branch
        %1760 = sbr.rel (%p1758) target = $region48
      $region47: #{_forward_impl.1} parent=43 // pred_region
        %p1761 = scmp.lt.s32.totalorder %s16, 1
        %s1762 = scalar_select %p1761, %s16, 1
        %s1763 = smul.addr %s1762, 6
        %s1764 = smul.addr %s1763, 8
        %s1765 = scalar_lea.vmem %s4, %s1764
      $region48: #{_forward_impl.1} parent=43 // pred_fallthru
        _
    $region44: #{_forward_impl.1} parent=5 // pred_fallthru
      _
  $region6: #{_forward_impl.1} parent=0 // loop_footer
    %s14 = sadd.s32 1, %s10
  $region7: #{_forward_impl.1} parent=0 // loop_footer_branch
    %9 = sbr.rel target = $region3
  $region8: #{_forward_impl.1} parent=0 // loop_exit
    _

</llo_original>
